<compile_context>
chip_gen: v7x
topology: tpu7x:2x2x1
jax: 0.10.0
libtpu: 0.0.40
codegen_flags: <defaults>
</compile_context>

<pallas_src>
import functools

import numpy as np
import jax
import jax.numpy as jnp
from jax import lax
from jax.experimental import pallas as pl
from jax.experimental.pallas import tpu as pltpu  # noqa: F401  (TPU backend assumed)


# --------------------------- init-time packing (numpy) -----------------------

def convtranspose_to_conv_weight(wt):
    """torch ConvTranspose2d weight (Cin, Cout, kh, kw), stride=1/pad=1 ->
    equivalent stride-1/pad-1 Conv2d weight in (kh, kw, Cin, Cout) layout."""
    w = np.asarray(wt)[:, :, ::-1, ::-1]
    return np.ascontiguousarray(np.transpose(w, (2, 3, 0, 1)))


def _band_weights_stacked(w_conv, W, width_dup=1):
    """(3,3,Ci,Co) conv weight -> stacked banded matrix (3*W*Ci, width_dup*W*Co)
    for the (rows=H, lanes=W*C) layout.  The W taps, the channel contraction and
    the W-direction zero padding all live in the band structure; the 3 H taps
    are separate lane blocks (used with two row-shift matmuls)."""
    Ci, Co = w_conv.shape[2], w_conv.shape[3]
    A = np.zeros((3 * W * Ci, W * Co), np.float32)
    for ky in range(3):
        for x in range(W):
            for kx in range(3):
                u = x + kx - 1
                if 0 <= u < W:
                    A[ky * W * Ci + u * Ci: ky * W * Ci + (u + 1) * Ci,
                      x * Co:(x + 1) * Co] = w_conv[ky, kx]
    if width_dup > 1:
        A = np.tile(A, (1, width_dup))
    return A


def _unpool_mats(B, hp, wp, c):
    """E: (2*wp*c, 2*wp*c) lane expansion (dx folded in);
       U: (B*2*hp, 2*B*hp) row expansion (dy + batch de-interleave folded in)."""
    wo, ho = 2 * wp, 2 * hp
    E = np.zeros((2 * wp * c, wo * c), np.float32)
    for ddx in range(2):
        for pw in range(wp):
            for ch in range(c):
                E[ddx * wp * c + pw * c + ch, (2 * pw + ddx) * c + ch] = 1.0
    U = np.zeros((B * ho, 2 * B * hp), np.float32)
    for ddy in range(2):
        for b in range(B):
            for ph in range(hp):
                U[b * ho + 2 * ph + ddy, ddy * B * hp + b * hp + ph] = 1.0
    return E, U


def _shift_mats(B, h):
    """Block-diagonal (per image) row-shift matrices: Sm picks row i-1, Sp row i+1."""
    Sm = np.zeros((B * h, B * h), np.float32)
    Sp = np.zeros((B * h, B * h), np.float32)
    for b in range(B):
        for i in range(h):
            if i > 0:
                Sm[b * h + i, b * h + i - 1] = 1.0
            if i < h - 1:
                Sp[b * h + i, b * h + i + 1] = 1.0
    return Sm, Sp


def _unpool_base(B, hp, wp, c, w_unpooled):
    """(2*B*hp, 2*wp*c) int32: expected torch flat pooling index for each
    (ddy | b,ph) row x (ddx | pw,ch) lane of the 2x2-tiled pooled operand."""
    rows, cols = 2 * B * hp, 2 * wp * c
    base = np.zeros((rows, cols), np.int32)
    for r in range(rows):
        ddy, ph = r // (B * hp), r % hp
        for l in range(cols):
            ddx, pw = l // (wp * c), (l % (wp * c)) // c
            base[r, l] = (2 * ph + ddy) * w_unpooled + (2 * pw + ddx)
    return base


def _channel_onehot(n_lanes, c):
    G = np.zeros((n_lanes, c), np.float32)
    for l in range(n_lanes):
        G[l, l % c] = 1.0
    return G


def _output_mats(B, H):
    """out[b, h] = r[b*H + h] as a masked matmul: out = Bsel @ (r * Hsel)."""
    Hsel = np.zeros((B * H, H), np.float32)
    Bsel = np.zeros((B, B * H), np.float32)
    for b in range(B):
        for h in range(H):
            Hsel[b * H + h, h] = 1.0
            Bsel[b, b * H + h] = 1.0
    return Hsel, Bsel


# --------------------------------- kernel ------------------------------------

def _decoder_kernel(n_stat, eps, c1,
                    x_ref, i2_ref, i1_ref, base2_ref, base1_ref,
                    e1_ref, u1_ref, sm1_ref, sp1_ref, a1_ref, b1_ref,
                    gamma_ref, beta_ref, g_ref, sumsel_ref, gt_ref,
                    e2_ref, u2_ref, sm2_ref, sp2_ref, a2_ref, b2_ref,
                    wout_ref, bout_ref, hsel_ref, bsel_ref,
                    o_ref):
    f32, bf16 = jnp.float32, jnp.bfloat16

    def mxu(a, b):
        # every matmul issued as a bf16 MXU op, f32 accumulate
        return jnp.dot(a.astype(bf16), b.astype(bf16), preferred_element_type=f32)

    def unpool(vals_big, idx_big, base, e_m, u_m):
        # MaxUnpool2d(2,2): keep the value only in the (dy,dx) quadrant named by
        # the torch pooling index, then expand lanes (E) and rows (U).
        sel = jnp.where(idx_big == base, vals_big, 0.0)
        return mxu(u_m, mxu(sel, e_m))

    def conv3x3(u, sm, sp, a_stack, b_row):
        # stride-1 / pad-1 3x3 conv in (rows=H, lanes=W*C) layout.
        x_up = mxu(sm, u)                       # row i <- u[i-1]   (ky = 0)
        x_dn = mxu(sp, u)                       # row i <- u[i+1]   (ky = 2)
        x3 = jnp.concatenate([x_up, u, x_dn], axis=1)   # 128-aligned lane blocks
        return mxu(x3, a_stack) + b_row

    # ------------- stage A: MaxUnpool2d(2,2) -> ConvTranspose2d(16->8) -------------
    u1 = unpool(x_ref[...], i2_ref[...], base2_ref[...], e1_ref[...], u1_ref[...])
    y1 = conv3x3(u1, sm1_ref[...], sp1_ref[...], a1_ref[...], b1_ref[...])
    # y1: (B*H1, 2*W1*C1) -- output lanes duplicated x2 (folded into a1/b1) so
    # stage B's unpool quadrant-select can consume it directly.

    # ------------- BatchNorm2d(C1) (training batch stats) + ReLU, fused ------------
    ycat = jnp.concatenate([y1, y1 * y1], axis=0)                     # (2*B*H1, 128)
    ch = mxu(sumsel_ref[...], mxu(ycat, g_ref[...]))                  # (2, C1): [sum; sumsq]
    mean = ch[0:1, :] / n_stat
    var = jnp.maximum(ch[1:2, :] / n_stat - mean * mean, 0.0)         # clamp >= 0
    scale = gamma_ref[...] * lax.rsqrt(var + eps)                     # (1, C1)
    shift = beta_ref[...] - mean * scale
    is_row0 = lax.broadcasted_iota(jnp.int32, (2, c1), 0) == 0
    ss = jnp.where(is_row0, jnp.broadcast_to(scale, (2, c1)),
                   jnp.broadcast_to(shift, (2, c1)))                  # [scale; shift]
    sc_sh = mxu(ss, gt_ref[...])                                      # (2, 128)
    z = jnp.maximum(y1 * sc_sh[0:1, :] + sc_sh[1:2, :], 0.0)          # (B*H1, 128)

    # ------------- stage B: MaxUnpool2d(2,2) -> ConvTranspose2d(8->3) --------------
    z_big = jnp.concatenate([z, z], axis=0)                           # dy duplication
    u2 = unpool(z_big, i1_ref[...], base1_ref[...], e2_ref[...], u2_ref[...])
    y2 = conv3x3(u2, sm2_ref[...], sp2_ref[...], a2_ref[...], b2_ref[...])  # (B*H2, W2*C0)

    # ------------- sigmoid -> output_transform Conv2d(3,1,(1,W)) -------------------
    s = jax.nn.sigmoid(y2)
    r = jnp.sum(s * wout_ref[...], axis=1, keepdims=True) + bout_ref[0, 0]  # (B*H2, 1)
    # lane-dense (B, H2) output: out[b, h] = r[b*H2 + h]
    o_ref[...] = mxu(bsel_ref[...], r * hsel_ref[...])


# --------------------------------- wrapper -----------------------------------

def make_decoder(params, B, H, W, eps=1e-5):
    """Pack all constant operands once (numpy, outside the per-call jit path) and
    return a jitted forward(x, idx_pool1, idx_pool2)."""
    C2, C1 = params["w1"].shape[2], params["w1"].shape[3]
    C0 = params["w2"].shape[3]
    Hp2, Wp2 = H // 4, W // 4
    H1, W1 = H // 2, W // 2
    H2, W2 = H, W
    bf = jnp.bfloat16

    E1, U1 = _unpool_mats(B, Hp2, Wp2, C2)          # (128,128), (16,16)
    E2, U2 = _unpool_mats(B, H1, W1, C1)            # (128,128), (32,32)
    Sm1, Sp1 = _shift_mats(B, H1)                   # (16,16)
    Sm2, Sp2 = _shift_mats(B, H2)                   # (32,32)
    base2 = _unpool_base(B, Hp2, Wp2, C2, W1)       # pool2 indices flat over (H1,W1)
    base1 = _unpool_base(B, H1, W1, C1, W2)         # pool1 indices flat over (H2,W2)
    A1 = _band_weights_stacked(params["w1"], W1, width_dup=2)   # (384, 128)
    A2 = _band_weights_stacked(params["w2"], W2, width_dup=1)   # (384, 48)
    G = _channel_onehot(2 * W1 * C1, C1)            # (128, 8)
    SUMSEL = np.zeros((2, 2 * B * H1), np.float32)  # picks [sum rows; sumsq rows]
    SUMSEL[0, :B * H1] = 1.0
    SUMSEL[1, B * H1:] = 1.0
    Hsel, Bsel = _output_mats(B, H2)

    consts = (
        jnp.asarray(base2), jnp.asarray(base1),
        jnp.asarray(E1, bf), jnp.asarray(U1, bf),
        jnp.asarray(Sm1, bf), jnp.asarray(Sp1, bf), jnp.asarray(A1, bf),
        jnp.asarray(np.tile(params["b1"].astype(np.float32), 2 * W1)[None, :]),
        jnp.asarray(params["gamma1"].astype(np.float32)[None, :]),
        jnp.asarray(params["beta1"].astype(np.float32)[None, :]),
        jnp.asarray(G, bf), jnp.asarray(SUMSEL, bf), jnp.asarray(G.T.copy(), bf),
        jnp.asarray(E2, bf), jnp.asarray(U2, bf),
        jnp.asarray(Sm2, bf), jnp.asarray(Sp2, bf), jnp.asarray(A2, bf),
        jnp.asarray(np.tile(params["b2"].astype(np.float32), W2)[None, :]),
        jnp.asarray(params["wconv"].astype(np.float32).reshape(1, W2 * C0)),
        jnp.asarray(np.asarray(params["bconv"], np.float32).reshape(1, 1)),
        jnp.asarray(Hsel, bf), jnp.asarray(Bsel, bf),
    )

    n_stat = float(2 * B * H1 * W1)   # BN count (x2: lane-duplicated copies)
    kernel = functools.partial(_decoder_kernel, n_stat, float(eps), C1)
    out_shape = jax.ShapeDtypeStruct((B, H2), jnp.float32)

    def forward(x_nchw, idx_pool1, idx_pool2):
        # NCHW -> (rows=B*h, lanes=w*C) layout, then 2x2 tile for the quadrant select.
        def rows2x2(a):
            b, c, h, w = a.shape
            r = jnp.transpose(a, (0, 2, 3, 1)).reshape(b * h, w * c)
            return jnp.tile(r, (2, 2))
        x_big = rows2x2(x_nchw.astype(jnp.float32))   # (16, 128) f32
        i2_big = rows2x2(idx_pool2)                   # (16, 128) i32
        i1_big = rows2x2(idx_pool1)                   # (32, 128) i32
        out = pl.pallas_call(kernel, out_shape=out_shape)(x_big, i2_big, i1_big, *consts)
        return out.reshape(B, 1, H2, 1)

    return jax.jit(forward)


# ------------------------------ jnp reference ---------------------------------

def reference_forward(x, idx1, idx2, params, eps=1e-5):
    def unpool(v, idx, oh, ow):
        b, c, h, w = v.shape
        out = jnp.zeros((b, c, oh * ow), v.dtype)
        out = jax.vmap(jax.vmap(lambda o, i, val: o.at[i].set(val)))(
            out, idx.reshape(b, c, h * w), v.reshape(b, c, h * w))
        return out.reshape(b, c, oh, ow)

    def conv3x3(v, w, bias):
        y = lax.conv_general_dilated(v, jnp.asarray(w), (1, 1), "SAME",
                                     dimension_numbers=("NCHW", "HWIO", "NCHW"))
        return y + jnp.asarray(bias).reshape(1, -1, 1, 1)

    H1, W1 = 2 * x.shape[2], 2 * x.shape[3]
    H2, W2 = 2 * H1, 2 * W1
    u1 = unpool(x, idx2, H1, W1)
    y1 = conv3x3(u1, params["w1"], params["b1"])
    mean = jnp.mean(y1, axis=(0, 2, 3), keepdims=True)
    var = jnp.mean((y1 - mean) ** 2, axis=(0, 2, 3), keepdims=True)
    z = (y1 - mean) * lax.rsqrt(var + eps)
    z = z * jnp.asarray(params["gamma1"]).reshape(1, -1, 1, 1) \
          + jnp.asarray(params["beta1"]).reshape(1, -1, 1, 1)
    z = jnp.maximum(z, 0.0)
    u2 = unpool(z, idx1, H2, W2)
    y2 = conv3x3(u2, params["w2"], params["b2"])
    s = jax.nn.sigmoid(y2)
    out = jnp.einsum("bchw,wc->bh", s, jnp.asarray(params["wconv"])) + params["bconv"]
    return out.reshape(x.shape[0], 1, H2, 1)


# ---------------------------------- main --------------------------------------

if __name__ == "__main__":
    key = jax.random.PRNGKey(0)
    B, H, W = 2, 16, 16
    C0, C1, C2 = 3, 8, 16          # encoder channels: 3 -> 8 -> 16
    ks = jax.random.split(key, 11)

    # ConvTranspose2d weights in torch layout (Cin, Cout, 3, 3) + biases
    wt1 = 0.1 * jax.random.normal(ks[0], (C2, C1, 3, 3), jnp.float32)
    bt1 = 0.1 * jax.random.normal(ks[1], (C1,), jnp.float32)
    wt2 = 0.1 * jax.random.normal(ks[2], (C1, C0, 3, 3), jnp.float32)
    bt2 = 0.1 * jax.random.normal(ks[3], (C0,), jnp.float32)
    # TODO(synk): output_transform source not provided; modeled as Conv2d(3,1,(1,W)).
    wcv = 0.1 * jax.random.normal(ks[4], (W, C0), jnp.float32)   # weight[kw, cin]
    bcv = 0.1 * jax.random.normal(ks[5], (), jnp.float32)

    params = {
        "w1": convtranspose_to_conv_weight(wt1), "b1": np.asarray(bt1),
        "gamma1": np.asarray(1.0 + 0.1 * jax.random.normal(ks[9], (C1,), jnp.float32)),
        "beta1": np.asarray(0.1 * jax.random.normal(ks[10], (C1,), jnp.float32)),
        "w2": convtranspose_to_conv_weight(wt2), "b2": np.asarray(bt2),
        "wconv": np.asarray(wcv), "bconv": np.asarray(bcv).reshape(()),
    }

    forward = make_decoder(params, B, H, W)

    # decoder input = encoder output (B, 16, H/4, W/4), NCHW
    x = jax.random.normal(ks[6], (B, C2, H // 4, W // 4), jnp.float32)

    # pool indices consistent with 2x2/stride-2 max pooling (torch flat layout)
    def make_indices(k, b, c, hp, wp, wo):
        dy = jax.random.randint(k, (b, c, hp, wp), 0, 2)
        dx = jax.random.randint(jax.random.fold_in(k, 1), (b, c, hp, wp), 0, 2)
        ph = jnp.arange(hp).reshape(1, 1, hp, 1)
        pw = jnp.arange(wp).reshape(1, 1, 1, wp)
        return ((2 * ph + dy) * wo + (2 * pw + dx)).astype(jnp.int32)

    idx_pool1 = make_indices(ks[7], B, C1, H // 2, W // 2, W)       # pooled (B,8,8,8)
    idx_pool2 = make_indices(ks[8], B, C2, H // 4, W // 4, W // 2)  # pooled (B,16,4,4)

    out = forward(x, idx_pool1, idx_pool2)
    out = jax.block_until_ready(out)
    assert out.shape == (B, 1, H, 1), out.shape
    assert bool(jnp.all(jnp.isfinite(out)))

    ref = jax.jit(lambda a, i1, i2: reference_forward(a, i1, i2, params))(
        x, idx_pool1, idx_pool2)
    ref = jax.block_until_ready(ref)
    np.testing.assert_allclose(np.asarray(out), np.asarray(ref), atol=5e-2, rtol=5e-2)
    print("KERNEL_OK")
</pallas_src>

<mosaic_0001>
module attributes {stable_mosaic.version = 11 : i64} {
  func.func @_decoder_kernel(%arg0: memref<16x128xf32, #tpu.memory_space<vmem>>, %arg1: memref<16x128xi32, #tpu.memory_space<vmem>>, %arg2: memref<32x128xi32, #tpu.memory_space<vmem>>, %arg3: memref<16x128xi32, #tpu.memory_space<vmem>>, %arg4: memref<32x128xi32, #tpu.memory_space<vmem>>, %arg5: memref<128x128xbf16, #tpu.memory_space<vmem>>, %arg6: memref<16x16xbf16, #tpu.memory_space<vmem>>, %arg7: memref<16x16xbf16, #tpu.memory_space<vmem>>, %arg8: memref<16x16xbf16, #tpu.memory_space<vmem>>, %arg9: memref<384x128xbf16, #tpu.memory_space<vmem>>, %arg10: memref<1x128xf32, #tpu.memory_space<vmem>>, %arg11: memref<1x8xf32, #tpu.memory_space<vmem>>, %arg12: memref<1x8xf32, #tpu.memory_space<vmem>>, %arg13: memref<128x8xbf16, #tpu.memory_space<vmem>>, %arg14: memref<2x32xbf16, #tpu.memory_space<vmem>>, %arg15: memref<8x128xbf16, #tpu.memory_space<vmem>>, %arg16: memref<128x128xbf16, #tpu.memory_space<vmem>>, %arg17: memref<32x32xbf16, #tpu.memory_space<vmem>>, %arg18: memref<32x32xbf16, #tpu.memory_space<vmem>>, %arg19: memref<32x32xbf16, #tpu.memory_space<vmem>>, %arg20: memref<384x48xbf16, #tpu.memory_space<vmem>>, %arg21: memref<1x48xf32, #tpu.memory_space<vmem>>, %arg22: memref<1x48xf32, #tpu.memory_space<vmem>>, %arg23: memref<1x1xf32, #tpu.memory_space<vmem>>, %arg24: memref<32x16xbf16, #tpu.memory_space<vmem>>, %arg25: memref<2x32xbf16, #tpu.memory_space<vmem>>, %arg26: memref<2x16xf32, #tpu.memory_space<vmem>>) attributes {dimension_semantics = [], scalar_prefetch = 0 : i64, scratch_operands = 0 : i64, tpu.core_type = #tpu.core_type<tc>} {
    %c0 = arith.constant 0 : index
    %c0_0 = arith.constant 0 : index
    %0 = vector.load %arg0[%c0, %c0_0] : memref<16x128xf32, #tpu.memory_space<vmem>>, vector<16x128xf32>
    %c0_1 = arith.constant 0 : index
    %c0_2 = arith.constant 0 : index
    %1 = vector.load %arg1[%c0_1, %c0_2] : memref<16x128xi32, #tpu.memory_space<vmem>>, vector<16x128xi32>
    %c0_3 = arith.constant 0 : index
    %c0_4 = arith.constant 0 : index
    %2 = vector.load %arg3[%c0_3, %c0_4] : memref<16x128xi32, #tpu.memory_space<vmem>>, vector<16x128xi32>
    %c0_5 = arith.constant 0 : index
    %c0_6 = arith.constant 0 : index
    %3 = vector.load %arg5[%c0_5, %c0_6] : memref<128x128xbf16, #tpu.memory_space<vmem>>, vector<128x128xbf16>
    %c0_7 = arith.constant 0 : index
    %c0_8 = arith.constant 0 : index
    %4 = vector.load %arg6[%c0_7, %c0_8] : memref<16x16xbf16, #tpu.memory_space<vmem>>, vector<16x16xbf16>
    %5 = arith.cmpi eq, %1, %2 : vector<16x128xi32>
    %cst = arith.constant 0.000000e+00 : f32
    %6 = vector.broadcast %cst : f32 to vector<16x128xf32>
    %7 = arith.select %5, %0, %6 : vector<16x128xi1>, vector<16x128xf32>
    %8 = arith.truncf %7 : vector<16x128xf32> to vector<16x128xbf16>
    %cst_9 = arith.constant dense<0.000000e+00> : vector<16x128xf32>
    %9 = tpu.matmul %8, %3, %cst_9 {dimension_numbers = #tpu.dot_dimension_numbers<[1], [0], [0], [1], [0, 0, 1, 1], [], []>} : vector<16x128xbf16>, vector<128x128xbf16>, vector<16x128xf32> -> vector<16x128xf32>
    %10 = arith.truncf %9 : vector<16x128xf32> to vector<16x128xbf16>
    %cst_10 = arith.constant dense<0.000000e+00> : vector<16x128xf32>
    %11 = tpu.matmul %4, %10, %cst_10 {dimension_numbers = #tpu.dot_dimension_numbers<[1], [0], [0], [1], [0, 0, 1, 1], [], []>} : vector<16x16xbf16>, vector<16x128xbf16>, vector<16x128xf32> -> vector<16x128xf32>
    %c0_11 = arith.constant 0 : index
    %c0_12 = arith.constant 0 : index
    %12 = vector.load %arg7[%c0_11, %c0_12] : memref<16x16xbf16, #tpu.memory_space<vmem>>, vector<16x16xbf16>
    %c0_13 = arith.constant 0 : index
    %c0_14 = arith.constant 0 : index
    %13 = vector.load %arg8[%c0_13, %c0_14] : memref<16x16xbf16, #tpu.memory_space<vmem>>, vector<16x16xbf16>
    %c0_15 = arith.constant 0 : index
    %c0_16 = arith.constant 0 : index
    %14 = vector.load %arg9[%c0_15, %c0_16] : memref<384x128xbf16, #tpu.memory_space<vmem>>, vector<384x128xbf16>
    %c0_17 = arith.constant 0 : index
    %c0_18 = arith.constant 0 : index
    %15 = vector.load %arg10[%c0_17, %c0_18] : memref<1x128xf32, #tpu.memory_space<vmem>>, vector<1x128xf32>
    %16 = arith.truncf %11 : vector<16x128xf32> to vector<16x128xbf16>
    %cst_19 = arith.constant dense<0.000000e+00> : vector<16x128xf32>
    %17 = tpu.matmul %12, %16, %cst_19 {dimension_numbers = #tpu.dot_dimension_numbers<[1], [0], [0], [1], [0, 0, 1, 1], [], []>} : vector<16x16xbf16>, vector<16x128xbf16>, vector<16x128xf32> -> vector<16x128xf32>
    %18 = arith.truncf %11 : vector<16x128xf32> to vector<16x128xbf16>
    %cst_20 = arith.constant dense<0.000000e+00> : vector<16x128xf32>
    %19 = tpu.matmul %13, %18, %cst_20 {dimension_numbers = #tpu.dot_dimension_numbers<[1], [0], [0], [1], [0, 0, 1, 1], [], []>} : vector<16x16xbf16>, vector<16x128xbf16>, vector<16x128xf32> -> vector<16x128xf32>
    %20 = tpu.concatenate %17, %11, %19 in 1 : vector<16x128xf32>, vector<16x128xf32>, vector<16x128xf32> -> vector<16x384xf32>
    %21 = arith.truncf %20 : vector<16x384xf32> to vector<16x384xbf16>
    %cst_21 = arith.constant dense<0.000000e+00> : vector<16x128xf32>
    %22 = tpu.matmul %21, %14, %cst_21 {dimension_numbers = #tpu.dot_dimension_numbers<[1], [0], [0], [1], [0, 0, 1, 1], [], []>} : vector<16x384xbf16>, vector<384x128xbf16>, vector<16x128xf32> -> vector<16x128xf32>
    %23 = vector.broadcast %15 : vector<1x128xf32> to vector<16x128xf32>
    %24 = arith.addf %22, %23 : vector<16x128xf32>
    %25 = arith.mulf %24, %24 : vector<16x128xf32>
    %26 = tpu.concatenate %24, %25 in 0 : vector<16x128xf32>, vector<16x128xf32> -> vector<32x128xf32>
    %c0_22 = arith.constant 0 : index
    %c0_23 = arith.constant 0 : index
    %27 = vector.load %arg14[%c0_22, %c0_23] : memref<2x32xbf16, #tpu.memory_space<vmem>>, vector<2x32xbf16>
    %c0_24 = arith.constant 0 : index
    %c0_25 = arith.constant 0 : index
    %28 = vector.load %arg13[%c0_24, %c0_25] : memref<128x8xbf16, #tpu.memory_space<vmem>>, vector<128x8xbf16>
    %29 = arith.truncf %26 : vector<32x128xf32> to vector<32x128xbf16>
    %cst_26 = arith.constant dense<0.000000e+00> : vector<32x8xf32>
    %30 = tpu.matmul %29, %28, %cst_26 {dimension_numbers = #tpu.dot_dimension_numbers<[1], [0], [0], [1], [0, 0, 1, 1], [], []>} : vector<32x128xbf16>, vector<128x8xbf16>, vector<32x8xf32> -> vector<32x8xf32>
    %31 = arith.truncf %30 : vector<32x8xf32> to vector<32x8xbf16>
    %cst_27 = arith.constant dense<0.000000e+00> : vector<2x8xf32>
    %32 = tpu.matmul %27, %31, %cst_27 {dimension_numbers = #tpu.dot_dimension_numbers<[1], [0], [0], [1], [0, 0, 1, 1], [], []>} : vector<2x32xbf16>, vector<32x8xbf16>, vector<2x8xf32> -> vector<2x8xf32>
    %33 = vector.extract_strided_slice %32 {offsets = [0, 0], sizes = [1, 8], strides = [1, 1]} : vector<2x8xf32> to vector<1x8xf32>
    %cst_28 = arith.constant 2.560000e+02 : f32
    %34 = vector.broadcast %cst_28 : f32 to vector<1x8xf32>
    %35 = arith.divf %33, %34 : vector<1x8xf32>
    %36 = vector.extract_strided_slice %32 {offsets = [1, 0], sizes = [1, 8], strides = [1, 1]} : vector<2x8xf32> to vector<1x8xf32>
    %cst_29 = arith.constant 2.560000e+02 : f32
    %37 = vector.broadcast %cst_29 : f32 to vector<1x8xf32>
    %38 = arith.divf %36, %37 : vector<1x8xf32>
    %39 = arith.mulf %35, %35 : vector<1x8xf32>
    %40 = arith.subf %38, %39 : vector<1x8xf32>
    %cst_30 = arith.constant 0.000000e+00 : f32
    %41 = vector.broadcast %cst_30 : f32 to vector<1x8xf32>
    %42 = arith.maximumf %40, %41 : vector<1x8xf32>
    %c0_31 = arith.constant 0 : index
    %c0_32 = arith.constant 0 : index
    %43 = vector.load %arg11[%c0_31, %c0_32] : memref<1x8xf32, #tpu.memory_space<vmem>>, vector<1x8xf32>
    %cst_33 = arith.constant 9.99999974E-6 : f32
    %44 = vector.broadcast %cst_33 : f32 to vector<1x8xf32>
    %45 = arith.addf %42, %44 : vector<1x8xf32>
    %46 = math.rsqrt %45 : vector<1x8xf32>
    %47 = arith.mulf %43, %46 : vector<1x8xf32>
    %c0_34 = arith.constant 0 : index
    %c0_35 = arith.constant 0 : index
    %48 = vector.load %arg12[%c0_34, %c0_35] : memref<1x8xf32, #tpu.memory_space<vmem>>, vector<1x8xf32>
    %49 = arith.mulf %35, %47 : vector<1x8xf32>
    %50 = arith.subf %48, %49 : vector<1x8xf32>
    %51 = tpu.iota {dimensions = array<i32: 0>} : vector<2x8xi32>
    %c0_i32 = arith.constant 0 : i32
    %52 = vector.broadcast %c0_i32 : i32 to vector<2x8xi32>
    %53 = arith.cmpi eq, %51, %52 : vector<2x8xi32>
    %54 = vector.shape_cast %47 : vector<1x8xf32> to vector<1x8xf32>
    %55 = vector.broadcast %54 : vector<1x8xf32> to vector<2x8xf32>
    %56 = vector.shape_cast %50 : vector<1x8xf32> to vector<1x8xf32>
    %57 = vector.broadcast %56 : vector<1x8xf32> to vector<2x8xf32>
    %58 = arith.select %53, %55, %57 : vector<2x8xi1>, vector<2x8xf32>
    %c0_36 = arith.constant 0 : index
    %c0_37 = arith.constant 0 : index
    %59 = vector.load %arg15[%c0_36, %c0_37] : memref<8x128xbf16, #tpu.memory_space<vmem>>, vector<8x128xbf16>
    %60 = arith.truncf %58 : vector<2x8xf32> to vector<2x8xbf16>
    %cst_38 = arith.constant dense<0.000000e+00> : vector<2x128xf32>
    %61 = tpu.matmul %60, %59, %cst_38 {dimension_numbers = #tpu.dot_dimension_numbers<[1], [0], [0], [1], [0, 0, 1, 1], [], []>} : vector<2x8xbf16>, vector<8x128xbf16>, vector<2x128xf32> -> vector<2x128xf32>
    %62 = vector.extract_strided_slice %61 {offsets = [0, 0], sizes = [1, 128], strides = [1, 1]} : vector<2x128xf32> to vector<1x128xf32>
    %63 = vector.broadcast %62 : vector<1x128xf32> to vector<16x128xf32>
    %64 = arith.mulf %24, %63 : vector<16x128xf32>
    %65 = vector.extract_strided_slice %61 {offsets = [1, 0], sizes = [1, 128], strides = [1, 1]} : vector<2x128xf32> to vector<1x128xf32>
    %66 = vector.broadcast %65 : vector<1x128xf32> to vector<16x128xf32>
    %67 = arith.addf %64, %66 : vector<16x128xf32>
    %cst_39 = arith.constant 0.000000e+00 : f32
    %68 = vector.broadcast %cst_39 : f32 to vector<16x128xf32>
    %69 = arith.maximumf %67, %68 : vector<16x128xf32>
    %70 = tpu.concatenate %69, %69 in 0 : vector<16x128xf32>, vector<16x128xf32> -> vector<32x128xf32>
    %c0_40 = arith.constant 0 : index
    %c0_41 = arith.constant 0 : index
    %71 = vector.load %arg2[%c0_40, %c0_41] : memref<32x128xi32, #tpu.memory_space<vmem>>, vector<32x128xi32>
    %c0_42 = arith.constant 0 : index
    %c0_43 = arith.constant 0 : index
    %72 = vector.load %arg4[%c0_42, %c0_43] : memref<32x128xi32, #tpu.memory_space<vmem>>, vector<32x128xi32>
    %c0_44 = arith.constant 0 : index
    %c0_45 = arith.constant 0 : index
    %73 = vector.load %arg16[%c0_44, %c0_45] : memref<128x128xbf16, #tpu.memory_space<vmem>>, vector<128x128xbf16>
    %c0_46 = arith.constant 0 : index
    %c0_47 = arith.constant 0 : index
    %74 = vector.load %arg17[%c0_46, %c0_47] : memref<32x32xbf16, #tpu.memory_space<vmem>>, vector<32x32xbf16>
    %75 = arith.cmpi eq, %71, %72 : vector<32x128xi32>
    %cst_48 = arith.constant 0.000000e+00 : f32
    %76 = vector.broadcast %cst_48 : f32 to vector<32x128xf32>
    %77 = arith.select %75, %70, %76 : vector<32x128xi1>, vector<32x128xf32>
    %78 = arith.truncf %77 : vector<32x128xf32> to vector<32x128xbf16>
    %cst_49 = arith.constant dense<0.000000e+00> : vector<32x128xf32>
    %79 = tpu.matmul %78, %73, %cst_49 {dimension_numbers = #tpu.dot_dimension_numbers<[1], [0], [0], [1], [0, 0, 1, 1], [], []>} : vector<32x128xbf16>, vector<128x128xbf16>, vector<32x128xf32> -> vector<32x128xf32>
    %80 = arith.truncf %79 : vector<32x128xf32> to vector<32x128xbf16>
    %cst_50 = arith.constant dense<0.000000e+00> : vector<32x128xf32>
    %81 = tpu.matmul %74, %80, %cst_50 {dimension_numbers = #tpu.dot_dimension_numbers<[1], [0], [0], [1], [0, 0, 1, 1], [], []>} : vector<32x32xbf16>, vector<32x128xbf16>, vector<32x128xf32> -> vector<32x128xf32>
    %c0_51 = arith.constant 0 : index
    %c0_52 = arith.constant 0 : index
    %82 = vector.load %arg18[%c0_51, %c0_52] : memref<32x32xbf16, #tpu.memory_space<vmem>>, vector<32x32xbf16>
    %c0_53 = arith.constant 0 : index
    %c0_54 = arith.constant 0 : index
    %83 = vector.load %arg19[%c0_53, %c0_54] : memref<32x32xbf16, #tpu.memory_space<vmem>>, vector<32x32xbf16>
    %c0_55 = arith.constant 0 : index
    %c0_56 = arith.constant 0 : index
    %84 = vector.load %arg20[%c0_55, %c0_56] : memref<384x48xbf16, #tpu.memory_space<vmem>>, vector<384x48xbf16>
    %c0_57 = arith.constant 0 : index
    %c0_58 = arith.constant 0 : index
    %85 = vector.load %arg21[%c0_57, %c0_58] : memref<1x48xf32, #tpu.memory_space<vmem>>, vector<1x48xf32>
    %86 = arith.truncf %81 : vector<32x128xf32> to vector<32x128xbf16>
    %cst_59 = arith.constant dense<0.000000e+00> : vector<32x128xf32>
    %87 = tpu.matmul %82, %86, %cst_59 {dimension_numbers = #tpu.dot_dimension_numbers<[1], [0], [0], [1], [0, 0, 1, 1], [], []>} : vector<32x32xbf16>, vector<32x128xbf16>, vector<32x128xf32> -> vector<32x128xf32>
    %88 = arith.truncf %81 : vector<32x128xf32> to vector<32x128xbf16>
    %cst_60 = arith.constant dense<0.000000e+00> : vector<32x128xf32>
    %89 = tpu.matmul %83, %88, %cst_60 {dimension_numbers = #tpu.dot_dimension_numbers<[1], [0], [0], [1], [0, 0, 1, 1], [], []>} : vector<32x32xbf16>, vector<32x128xbf16>, vector<32x128xf32> -> vector<32x128xf32>
    %90 = tpu.concatenate %87, %81, %89 in 1 : vector<32x128xf32>, vector<32x128xf32>, vector<32x128xf32> -> vector<32x384xf32>
    %91 = arith.truncf %90 : vector<32x384xf32> to vector<32x384xbf16>
    %cst_61 = arith.constant dense<0.000000e+00> : vector<32x48xf32>
    %92 = tpu.matmul %91, %84, %cst_61 {dimension_numbers = #tpu.dot_dimension_numbers<[1], [0], [0], [1], [0, 0, 1, 1], [], []>} : vector<32x384xbf16>, vector<384x48xbf16>, vector<32x48xf32> -> vector<32x48xf32>
    %93 = vector.broadcast %85 : vector<1x48xf32> to vector<32x48xf32>
    %94 = arith.addf %92, %93 : vector<32x48xf32>
    %95 = arith.negf %94 : vector<32x48xf32>
    %96 = math.exp %95 : vector<32x48xf32>
    %cst_62 = arith.constant 1.000000e+00 : f32
    %97 = vector.broadcast %cst_62 : f32 to vector<32x48xf32>
    %98 = arith.addf %97, %96 : vector<32x48xf32>
    %99 = arith.divf %97, %98 : vector<32x48xf32>
    %c0_63 = arith.constant 0 : index
    %c0_64 = arith.constant 0 : index
    %100 = vector.load %arg22[%c0_63, %c0_64] : memref<1x48xf32, #tpu.memory_space<vmem>>, vector<1x48xf32>
    %101 = vector.broadcast %100 : vector<1x48xf32> to vector<32x48xf32>
    %102 = arith.mulf %99, %101 : vector<32x48xf32>
    %cst_65 = arith.constant dense<0.000000e+00> : vector<32xf32>
    %103 = vector.multi_reduction <add>, %102, %cst_65 [1] : vector<32x48xf32> to vector<32xf32>
    %104 = vector.shape_cast %103 : vector<32xf32> to vector<32x1xf32>
    %c0_66 = arith.constant 0 : index
    %c0_67 = arith.constant 0 : index
    %105 = vector.load %arg23[%c0_66, %c0_67] : memref<1x1xf32, #tpu.memory_space<vmem>>, vector<1x1xf32>
    %106 = vector.extract %105[0, 0] : f32 from vector<1x1xf32>
    %107 = vector.broadcast %106 : f32 to vector<32x1xf32>
    %108 = arith.addf %104, %107 : vector<32x1xf32>
    %c0_68 = arith.constant 0 : index
    %c0_69 = arith.constant 0 : index
    %109 = vector.load %arg25[%c0_68, %c0_69] : memref<2x32xbf16, #tpu.memory_space<vmem>>, vector<2x32xbf16>
    %c0_70 = arith.constant 0 : index
    %c0_71 = arith.constant 0 : index
    %110 = vector.load %arg24[%c0_70, %c0_71] : memref<32x16xbf16, #tpu.memory_space<vmem>>, vector<32x16xbf16>
    %111 = arith.extf %110 : vector<32x16xbf16> to vector<32x16xf32>
    %112 = vector.broadcast %108 : vector<32x1xf32> to vector<32x16xf32>
    %113 = arith.mulf %112, %111 : vector<32x16xf32>
    %114 = arith.truncf %113 : vector<32x16xf32> to vector<32x16xbf16>
    %cst_72 = arith.constant dense<0.000000e+00> : vector<2x16xf32>
    %115 = tpu.matmul %109, %114, %cst_72 {dimension_numbers = #tpu.dot_dimension_numbers<[1], [0], [0], [1], [0, 0, 1, 1], [], []>} : vector<2x32xbf16>, vector<32x16xbf16>, vector<2x16xf32> -> vector<2x16xf32>
    %c0_73 = arith.constant 0 : index
    %c0_74 = arith.constant 0 : index
    %116 = vector.load %arg26[%c0_73, %c0_74] : memref<2x16xf32, #tpu.memory_space<vmem>>, vector<2x16xf32>
    tpu.vector_store %arg26[%c0_73, %c0_74], %115 {strides = array<i32>} : memref<2x16xf32, #tpu.memory_space<vmem>>, vector<2x16xf32>,
    return
  }
}

</mosaic_0001>

<llo_original>
// kernel: tile.23
$region0: #{tile.23}
  %s0 = inlined_call_operand.vmem [shape: s32[2,16,2,64], index: 0, kind: input, shape index: {}]
  %s1 = inlined_call_operand.vmem [shape: s32[32,128], index: 1, kind: output, shape index: {}]
  $region1: #{tile.23} parent=0
    #allocation0 [shape = 'u8[131072]{0}', space=vmem, size = 0x20000, scoped, tag = 'scoped mem for input reshape']
    %s3 = sshllo.u32 0, 2
    %s4 = smul.addr 2, 31
    %s5 = scalar_lea.vmem %s0, %s4
    %v6 = vld [vmem:[%s5] sm:%s3]
    %s7 = scalar_lea.vmem [#allocation0], 248
    %8 = vst [vmem:[%s7] sm:%s3] %v6
    %s9 = smul.addr 2, 30
    %s10 = scalar_lea.vmem %s0, %s9
    %v11 = vld [vmem:[%s10] sm:%s3]
    %s12 = scalar_lea.vmem [#allocation0], 240
    %13 = vst [vmem:[%s12] sm:%s3] %v11
    %s14 = smul.addr 2, 29
    %s15 = scalar_lea.vmem %s0, %s14
    %v16 = vld [vmem:[%s15] sm:%s3]
    %s17 = scalar_lea.vmem [#allocation0], 232
    %18 = vst [vmem:[%s17] sm:%s3] %v16
    %s19 = smul.addr 2, 28
    %s20 = scalar_lea.vmem %s0, %s19
    %v21 = vld [vmem:[%s20] sm:%s3]
    %s22 = scalar_lea.vmem [#allocation0], 224
    %23 = vst [vmem:[%s22] sm:%s3] %v21
    %s24 = smul.addr 2, 27
    %s25 = scalar_lea.vmem %s0, %s24
    %v26 = vld [vmem:[%s25] sm:%s3]
    %s27 = scalar_lea.vmem [#allocation0], 216
    %28 = vst [vmem:[%s27] sm:%s3] %v26
    %s29 = smul.addr 2, 26
    %s30 = scalar_lea.vmem %s0, %s29
    %v31 = vld [vmem:[%s30] sm:%s3]
    %s32 = scalar_lea.vmem [#allocation0], 208
    %33 = vst [vmem:[%s32] sm:%s3] %v31
    %s34 = smul.addr 2, 25
    %s35 = scalar_lea.vmem %s0, %s34
    %v36 = vld [vmem:[%s35] sm:%s3]
    %s37 = scalar_lea.vmem [#allocation0], 200
    %38 = vst [vmem:[%s37] sm:%s3] %v36
    %s39 = smul.addr 2, 24
    %s40 = scalar_lea.vmem %s0, %s39
    %v41 = vld [vmem:[%s40] sm:%s3]
    %s42 = scalar_lea.vmem [#allocation0], 192
    %43 = vst [vmem:[%s42] sm:%s3] %v41
    %s44 = smul.addr 2, 23
    %s45 = scalar_lea.vmem %s0, %s44
    %v46 = vld [vmem:[%s45] sm:%s3]
    %s47 = scalar_lea.vmem [#allocation0], 184
    %48 = vst [vmem:[%s47] sm:%s3] %v46
    %s49 = smul.addr 2, 22
    %s50 = scalar_lea.vmem %s0, %s49
    %v51 = vld [vmem:[%s50] sm:%s3]
    %s52 = scalar_lea.vmem [#allocation0], 176
    %53 = vst [vmem:[%s52] sm:%s3] %v51
    %s54 = smul.addr 2, 21
    %s55 = scalar_lea.vmem %s0, %s54
    %v56 = vld [vmem:[%s55] sm:%s3]
    %s57 = scalar_lea.vmem [#allocation0], 168
    %58 = vst [vmem:[%s57] sm:%s3] %v56
    %s59 = smul.addr 2, 20
    %s60 = scalar_lea.vmem %s0, %s59
    %v61 = vld [vmem:[%s60] sm:%s3]
    %s62 = scalar_lea.vmem [#allocation0], 160
    %63 = vst [vmem:[%s62] sm:%s3] %v61
    %s64 = smul.addr 2, 19
    %s65 = scalar_lea.vmem %s0, %s64
    %v66 = vld [vmem:[%s65] sm:%s3]
    %s67 = scalar_lea.vmem [#allocation0], 152
    %68 = vst [vmem:[%s67] sm:%s3] %v66
    %s69 = smul.addr 2, 18
    %s70 = scalar_lea.vmem %s0, %s69
    %v71 = vld [vmem:[%s70] sm:%s3]
    %s72 = scalar_lea.vmem [#allocation0], 144
    %73 = vst [vmem:[%s72] sm:%s3] %v71
    %s74 = smul.addr 2, 17
    %s75 = scalar_lea.vmem %s0, %s74
    %v76 = vld [vmem:[%s75] sm:%s3]
    %s77 = scalar_lea.vmem [#allocation0], 136
    %78 = vst [vmem:[%s77] sm:%s3] %v76
    %s79 = smul.addr 2, 16
    %s80 = scalar_lea.vmem %s0, %s79
    %v81 = vld [vmem:[%s80] sm:%s3]
    %s82 = scalar_lea.vmem [#allocation0], 128
    %83 = vst [vmem:[%s82] sm:%s3] %v81
    %s84 = smul.addr 2, 15
    %s85 = scalar_lea.vmem %s0, %s84
    %v86 = vld [vmem:[%s85] sm:%s3]
    %s87 = scalar_lea.vmem [#allocation0], 120
    %88 = vst [vmem:[%s87] sm:%s3] %v86
    %s89 = smul.addr 2, 14
    %s90 = scalar_lea.vmem %s0, %s89
    %v91 = vld [vmem:[%s90] sm:%s3]
    %s92 = scalar_lea.vmem [#allocation0], 112
    %93 = vst [vmem:[%s92] sm:%s3] %v91
    %s94 = smul.addr 2, 13
    %s95 = scalar_lea.vmem %s0, %s94
    %v96 = vld [vmem:[%s95] sm:%s3]
    %s97 = scalar_lea.vmem [#allocation0], 104
    %98 = vst [vmem:[%s97] sm:%s3] %v96
    %s99 = smul.addr 2, 12
    %s100 = scalar_lea.vmem %s0, %s99
    %v101 = vld [vmem:[%s100] sm:%s3]
    %s102 = scalar_lea.vmem [#allocation0], 96
    %103 = vst [vmem:[%s102] sm:%s3] %v101
    %s104 = smul.addr 2, 11
    %s105 = scalar_lea.vmem %s0, %s104
    %v106 = vld [vmem:[%s105] sm:%s3]
    %s107 = scalar_lea.vmem [#allocation0], 88
    %108 = vst [vmem:[%s107] sm:%s3] %v106
    %s109 = smul.addr 2, 10
    %s110 = scalar_lea.vmem %s0, %s109
    %v111 = vld [vmem:[%s110] sm:%s3]
    %s112 = scalar_lea.vmem [#allocation0], 80
    %113 = vst [vmem:[%s112] sm:%s3] %v111
    %s114 = smul.addr 2, 9
    %s115 = scalar_lea.vmem %s0, %s114
    %v116 = vld [vmem:[%s115] sm:%s3]
    %s117 = scalar_lea.vmem [#allocation0], 72
    %118 = vst [vmem:[%s117] sm:%s3] %v116
    %s119 = smul.addr 2, 8
    %s120 = scalar_lea.vmem %s0, %s119
    %v121 = vld [vmem:[%s120] sm:%s3]
    %s122 = scalar_lea.vmem [#allocation0], 64
    %123 = vst [vmem:[%s122] sm:%s3] %v121
    %s124 = smul.addr 2, 7
    %s125 = scalar_lea.vmem %s0, %s124
    %v126 = vld [vmem:[%s125] sm:%s3]
    %s127 = scalar_lea.vmem [#allocation0], 56
    %128 = vst [vmem:[%s127] sm:%s3] %v126
    %s129 = smul.addr 2, 6
    %s130 = scalar_lea.vmem %s0, %s129
    %v131 = vld [vmem:[%s130] sm:%s3]
    %s132 = scalar_lea.vmem [#allocation0], 48
    %133 = vst [vmem:[%s132] sm:%s3] %v131
    %s134 = smul.addr 2, 5
    %s135 = scalar_lea.vmem %s0, %s134
    %v136 = vld [vmem:[%s135] sm:%s3]
    %s137 = scalar_lea.vmem [#allocation0], 40
    %138 = vst [vmem:[%s137] sm:%s3] %v136
    %s139 = smul.addr 2, 4
    %s140 = scalar_lea.vmem %s0, %s139
    %v141 = vld [vmem:[%s140] sm:%s3]
    %s142 = scalar_lea.vmem [#allocation0], 32
    %143 = vst [vmem:[%s142] sm:%s3] %v141
    %s144 = smul.addr 2, 3
    %s145 = scalar_lea.vmem %s0, %s144
    %v146 = vld [vmem:[%s145] sm:%s3]
    %s147 = scalar_lea.vmem [#allocation0], 24
    %148 = vst [vmem:[%s147] sm:%s3] %v146
    %s149 = smul.addr 2, 2
    %s150 = scalar_lea.vmem %s0, %s149
    %v151 = vld [vmem:[%s150] sm:%s3]
    %s152 = scalar_lea.vmem [#allocation0], 16
    %153 = vst [vmem:[%s152] sm:%s3] %v151
    %s154 = scalar_lea.vmem %s0, 2
    %v155 = vld [vmem:[%s154] sm:%s3]
    %s156 = scalar_lea.vmem [#allocation0], 8
    %157 = vst [vmem:[%s156] sm:%s3] %v155
    %v158 = vld [vmem:[%s0] sm:%s3]
    %159 = vst [vmem:[#allocation0] sm:%s3] %v158
    %v160 = vld [vmem:[#allocation0] ss:$8 sm:$0xf]
    %v161 = vld [vmem:[#allocation0] ss:$8 sm:$0xf0]
    %vm162 = vcmask 1047556
    %v163 = vsel %vm162, %v161, %v160
    %vm164 = vcmask 523264
    %165 = vst.msk [vmem:[%s1] sm:$0xff] %vm164, %v163
    %s166 = scalar_lea.vmem [#allocation0], 64
    %v167 = vld [vmem:[%s166] ss:$8 sm:$0xf]
    %s168 = scalar_lea.vmem [#allocation0], 64
    %v169 = vld [vmem:[%s168] ss:$8 sm:$0xf0]
    %vm170 = vcmask 1047556
    %v171 = vsel %vm170, %v169, %v167
    %vm172 = vcmask 523264
    %s173 = scalar_lea.vmem %s1, 8
    %174 = vst.msk [vmem:[%s173] sm:$0xff] %vm172, %v171
    %s175 = scalar_lea.vmem [#allocation0], 128
    %v176 = vld [vmem:[%s175] ss:$8 sm:$0xf]
    %s177 = scalar_lea.vmem [#allocation0], 128
    %v178 = vld [vmem:[%s177] ss:$8 sm:$0xf0]
    %vm179 = vcmask 1047556
    %v180 = vsel %vm179, %v178, %v176
    %vm181 = vcmask 523264
    %s182 = scalar_lea.vmem %s1, 16
    %183 = vst.msk [vmem:[%s182] sm:$0xff] %vm181, %v180
    %s184 = scalar_lea.vmem [#allocation0], 192
    %v185 = vld [vmem:[%s184] ss:$8 sm:$0xf]
    %s186 = scalar_lea.vmem [#allocation0], 192
    %v187 = vld [vmem:[%s186] ss:$8 sm:$0xf0]
    %vm188 = vcmask 1047556
    %v189 = vsel %vm188, %v187, %v185
    %vm190 = vcmask 523264
    %s191 = scalar_lea.vmem %s1, 24
    %192 = vst.msk [vmem:[%s191] sm:$0xff] %vm190, %v189
    %s193 = scalar_lea.vmem [#allocation0], 1
    %v194 = vld [vmem:[%s193] ss:$8 sm:$0xf]
    %s195 = scalar_lea.vmem [#allocation0], 1
    %v196 = vld [vmem:[%s195] ss:$8 sm:$0xf0]
    %vm197 = vcmask 1047556
    %v198 = vsel %vm197, %v196, %v194
    %199 = vrot.lane.b32.xlu0 %v198, 64
    %v200 = vpop.permute.xlu0 %199
    %vm201 = vcmask 1048064
    %202 = vst.msk [vmem:[%s1] sm:$0xff] %vm201, %v200
    %s203 = scalar_lea.vmem [#allocation0], 65
    %v204 = vld [vmem:[%s203] ss:$8 sm:$0xf]
    %s205 = scalar_lea.vmem [#allocation0], 65
    %v206 = vld [vmem:[%s205] ss:$8 sm:$0xf0]
    %vm207 = vcmask 1047556
    %v208 = vsel %vm207, %v206, %v204
    %209 = vrot.lane.b32.xlu0 %v208, 64
    %v210 = vpop.permute.xlu0 %209
    %vm211 = vcmask 1048064
    %s212 = scalar_lea.vmem %s1, 8
    %213 = vst.msk [vmem:[%s212] sm:$0xff] %vm211, %v210
    %s214 = scalar_lea.vmem [#allocation0], 129
    %v215 = vld [vmem:[%s214] ss:$8 sm:$0xf]
    %s216 = scalar_lea.vmem [#allocation0], 129
    %v217 = vld [vmem:[%s216] ss:$8 sm:$0xf0]
    %vm218 = vcmask 1047556
    %v219 = vsel %vm218, %v217, %v215
    %220 = vrot.lane.b32.xlu0 %v219, 64
    %v221 = vpop.permute.xlu0 %220
    %vm222 = vcmask 1048064
    %s223 = scalar_lea.vmem %s1, 16
    %224 = vst.msk [vmem:[%s223] sm:$0xff] %vm222, %v221
    %s225 = scalar_lea.vmem [#allocation0], 193
    %v226 = vld [vmem:[%s225] ss:$8 sm:$0xf]
    %s227 = scalar_lea.vmem [#allocation0], 193
    %v228 = vld [vmem:[%s227] ss:$8 sm:$0xf0]
    %vm229 = vcmask 1047556
    %v230 = vsel %vm229, %v228, %v226
    %231 = vrot.lane.b32.xlu0 %v230, 64
    %v232 = vpop.permute.xlu0 %231
    %vm233 = vcmask 1048064
    %s234 = scalar_lea.vmem %s1, 24
    %235 = vst.msk [vmem:[%s234] sm:$0xff] %vm233, %v232

// kernel: tile.22
$region0: #{tile.22}
  #allocation0 [shape = 's32[1]{0}', space=sflag, size = 0x4, scoped, tag = 'scoped memory for tile.22']
  %s0 = inlined_call_operand.vmem [shape: s32[16,64], index: 0, kind: input, shape index: {}]
  %s1 = inlined_call_operand.vmem [shape: s32[2,16,2,64], index: 1, kind: output, shape index: {}]
  // Predicated region
  $region2: #{tile.22} parent=0 // pred_check
    _
  $region3: #{tile.22} parent=0 // pred_check_branch
    %3 = sbr.rel (0) target = $region5
  $region4: #{tile.22} parent=0 // pred_region
    _
  $region5: #{tile.22} parent=0 // pred_fallthru
    _
  %v4 = vld [vmem:[%s0] ss:$0 sm:$0xff]
  %5 = vst [vmem:[%s1] sm:$0x3] %v4
  %s6 = scalar_lea.vmem %s1, 32
  %7 = vst [vmem:[%s6] sm:$0x3] %v4
  %s8 = scalar_lea.vmem %s0, 1
  %v9 = vld [vmem:[%s8] ss:$0 sm:$0xff]
  %s10 = scalar_lea.vmem %s1, 2
  %11 = vst [vmem:[%s10] sm:$0x3] %v9
  %s12 = scalar_lea.vmem %s1, 34
  %13 = vst [vmem:[%s12] sm:$0x3] %v9
  %s14 = scalar_lea.vmem %s0, 2
  %v15 = vld [vmem:[%s14] ss:$0 sm:$0xff]
  %s16 = scalar_lea.vmem %s1, 4
  %17 = vst [vmem:[%s16] sm:$0x3] %v15
  %s18 = scalar_lea.vmem %s1, 36
  %19 = vst [vmem:[%s18] sm:$0x3] %v15
  %s20 = scalar_lea.vmem %s0, 3
  %v21 = vld [vmem:[%s20] ss:$0 sm:$0xff]
  %s22 = scalar_lea.vmem %s1, 6
  %23 = vst [vmem:[%s22] sm:$0x3] %v21
  %s24 = scalar_lea.vmem %s1, 38
  %25 = vst [vmem:[%s24] sm:$0x3] %v21
  %s26 = scalar_lea.vmem %s0, 4
  %v27 = vld [vmem:[%s26] ss:$0 sm:$0xff]
  %s28 = scalar_lea.vmem %s1, 8
  %29 = vst [vmem:[%s28] sm:$0x3] %v27
  %s30 = scalar_lea.vmem %s1, 40
  %31 = vst [vmem:[%s30] sm:$0x3] %v27
  %s32 = scalar_lea.vmem %s0, 5
  %v33 = vld [vmem:[%s32] ss:$0 sm:$0xff]
  %s34 = scalar_lea.vmem %s1, 10
  %35 = vst [vmem:[%s34] sm:$0x3] %v33
  %s36 = scalar_lea.vmem %s1, 42
  %37 = vst [vmem:[%s36] sm:$0x3] %v33
  %s38 = scalar_lea.vmem %s0, 6
  %v39 = vld [vmem:[%s38] ss:$0 sm:$0xff]
  %s40 = scalar_lea.vmem %s1, 12
  %41 = vst [vmem:[%s40] sm:$0x3] %v39
  %s42 = scalar_lea.vmem %s1, 44
  %43 = vst [vmem:[%s42] sm:$0x3] %v39
  %s44 = scalar_lea.vmem %s0, 7
  %v45 = vld [vmem:[%s44] ss:$0 sm:$0xff]
  %s46 = scalar_lea.vmem %s1, 14
  %47 = vst [vmem:[%s46] sm:$0x3] %v45
  %s48 = scalar_lea.vmem %s1, 46
  %49 = vst [vmem:[%s48] sm:$0x3] %v45
  %s50 = scalar_lea.vmem %s0, 8
  %v51 = vld [vmem:[%s50] ss:$0 sm:$0xff]
  %s52 = scalar_lea.vmem %s1, 16
  %53 = vst [vmem:[%s52] sm:$0x3] %v51
  %s54 = scalar_lea.vmem %s1, 48
  %55 = vst [vmem:[%s54] sm:$0x3] %v51
  %s56 = scalar_lea.vmem %s0, 8
  %s57 = scalar_lea.vmem %s56, 1
  %v58 = vld [vmem:[%s57] ss:$0 sm:$0xff]
  %s59 = scalar_lea.vmem %s1, 18
  %60 = vst [vmem:[%s59] sm:$0x3] %v58
  %s61 = scalar_lea.vmem %s1, 50
  %62 = vst [vmem:[%s61] sm:$0x3] %v58
  %s63 = scalar_lea.vmem %s0, 8
  %s64 = scalar_lea.vmem %s63, 2
  %v65 = vld [vmem:[%s64] ss:$0 sm:$0xff]
  %s66 = scalar_lea.vmem %s1, 20
  %67 = vst [vmem:[%s66] sm:$0x3] %v65
  %s68 = scalar_lea.vmem %s1, 52
  %69 = vst [vmem:[%s68] sm:$0x3] %v65
  %s70 = scalar_lea.vmem %s0, 8
  %s71 = scalar_lea.vmem %s70, 3
  %v72 = vld [vmem:[%s71] ss:$0 sm:$0xff]
  %s73 = scalar_lea.vmem %s1, 22
  %74 = vst [vmem:[%s73] sm:$0x3] %v72
  %s75 = scalar_lea.vmem %s1, 54
  %76 = vst [vmem:[%s75] sm:$0x3] %v72
  %s77 = scalar_lea.vmem %s0, 8
  %s78 = scalar_lea.vmem %s77, 4
  %v79 = vld [vmem:[%s78] ss:$0 sm:$0xff]
  %s80 = scalar_lea.vmem %s1, 24
  %81 = vst [vmem:[%s80] sm:$0x3] %v79
  %s82 = scalar_lea.vmem %s1, 56
  %83 = vst [vmem:[%s82] sm:$0x3] %v79
  %s84 = scalar_lea.vmem %s0, 8
  %s85 = scalar_lea.vmem %s84, 5
  %v86 = vld [vmem:[%s85] ss:$0 sm:$0xff]
  %s87 = scalar_lea.vmem %s1, 26
  %88 = vst [vmem:[%s87] sm:$0x3] %v86
  %s89 = scalar_lea.vmem %s1, 58
  %90 = vst [vmem:[%s89] sm:$0x3] %v86
  %s91 = scalar_lea.vmem %s0, 8
  %s92 = scalar_lea.vmem %s91, 6
  %v93 = vld [vmem:[%s92] ss:$0 sm:$0xff]
  %s94 = scalar_lea.vmem %s1, 28
  %95 = vst [vmem:[%s94] sm:$0x3] %v93
  %s96 = scalar_lea.vmem %s1, 60
  %97 = vst [vmem:[%s96] sm:$0x3] %v93
  %s98 = scalar_lea.vmem %s0, 8
  %s99 = scalar_lea.vmem %s98, 7
  %v100 = vld [vmem:[%s99] ss:$0 sm:$0xff]
  %s101 = scalar_lea.vmem %s1, 30
  %102 = vst [vmem:[%s101] sm:$0x3] %v100
  %s103 = scalar_lea.vmem %s1, 62
  %104 = vst [vmem:[%s103] sm:$0x3] %v100

// kernel: tile.21
$region0: #{tile.21}
  %s0 = inlined_call_operand.vmem [shape: s32[2,8,8,8], index: 0, kind: input, shape index: {}]
  %s1 = inlined_call_operand.vmem [shape: s32[16,64], index: 1, kind: output, shape index: {}]
  %v2 = vld [vmem:[%s0] ss:$8 sm:$0xf]
  %v3 = vld [vmem:[%s0] ss:$8 sm:$0xf0]
  %vm4 = vcmask 1047556
  %v5 = vsel %vm4, %v3, %v2
  %vm6 = vcmask 64512
  %7 = vst.msk [vmem:[%s1] sm:$0xff] %vm6, %v5
  %s8 = scalar_lea.vmem %s0, 64
  %v9 = vld [vmem:[%s8] ss:$8 sm:$0xf]
  %s10 = scalar_lea.vmem %s0, 64
  %v11 = vld [vmem:[%s10] ss:$8 sm:$0xf0]
  %vm12 = vcmask 1047556
  %v13 = vsel %vm12, %v11, %v9
  %vm14 = vcmask 64512
  %s15 = scalar_lea.vmem %s1, 8
  %16 = vst.msk [vmem:[%s15] sm:$0xff] %vm14, %v13
  %s17 = scalar_lea.vmem %s0, 7
  %v18 = vld [vmem:[%s17] ss:$8 sm:$0xf]
  %s19 = scalar_lea.vmem %s0, 7
  %v20 = vld [vmem:[%s19] ss:$8 sm:$0xf0]
  %vm21 = vcmask 1047556
  %v22 = vsel %vm21, %v20, %v18
  %23 = vrot.lane.b32.xlu0 %v22, 56
  %v24 = vpop.permute.xlu0 %23
  %vm25 = vcmask 523712
  %26 = vst.msk [vmem:[%s1] sm:$0xff] %vm25, %v24
  %s27 = scalar_lea.vmem %s0, 71
  %v28 = vld [vmem:[%s27] ss:$8 sm:$0xf]
  %s29 = scalar_lea.vmem %s0, 71
  %v30 = vld [vmem:[%s29] ss:$8 sm:$0xf0]
  %vm31 = vcmask 1047556
  %v32 = vsel %vm31, %v30, %v28
  %33 = vrot.lane.b32.xlu0 %v32, 56
  %v34 = vpop.permute.xlu0 %33
  %vm35 = vcmask 523712
  %s36 = scalar_lea.vmem %s1, 8
  %37 = vst.msk [vmem:[%s36] sm:$0xff] %vm35, %v34
  %s38 = scalar_lea.vmem %s0, 6
  %v39 = vld [vmem:[%s38] ss:$8 sm:$0xf]
  %s40 = scalar_lea.vmem %s0, 6
  %v41 = vld [vmem:[%s40] ss:$8 sm:$0xf0]
  %vm42 = vcmask 1047556
  %v43 = vsel %vm42, %v41, %v39
  %44 = vrot.lane.b32.xlu0 %v43, 48
  %v45 = vpop.permute.xlu0 %44
  %vm46 = vcmask 458112
  %47 = vst.msk [vmem:[%s1] sm:$0xff] %vm46, %v45
  %s48 = scalar_lea.vmem %s0, 70
  %v49 = vld [vmem:[%s48] ss:$8 sm:$0xf]
  %s50 = scalar_lea.vmem %s0, 70
  %v51 = vld [vmem:[%s50] ss:$8 sm:$0xf0]
  %vm52 = vcmask 1047556
  %v53 = vsel %vm52, %v51, %v49
  %54 = vrot.lane.b32.xlu0 %v53, 48
  %v55 = vpop.permute.xlu0 %54
  %vm56 = vcmask 458112
  %s57 = scalar_lea.vmem %s1, 8
  %58 = vst.msk [vmem:[%s57] sm:$0xff] %vm56, %v55
  %s59 = scalar_lea.vmem %s0, 5
  %v60 = vld [vmem:[%s59] ss:$8 sm:$0xf]
  %s61 = scalar_lea.vmem %s0, 5
  %v62 = vld [vmem:[%s61] ss:$8 sm:$0xf0]
  %vm63 = vcmask 1047556
  %v64 = vsel %vm63, %v62, %v60
  %65 = vrot.lane.b32.xlu0 %v64, 40
  %v66 = vpop.permute.xlu0 %65
  %vm67 = vcmask 392512
  %68 = vst.msk [vmem:[%s1] sm:$0xff] %vm67, %v66
  %s69 = scalar_lea.vmem %s0, 69
  %v70 = vld [vmem:[%s69] ss:$8 sm:$0xf]
  %s71 = scalar_lea.vmem %s0, 69
  %v72 = vld [vmem:[%s71] ss:$8 sm:$0xf0]
  %vm73 = vcmask 1047556
  %v74 = vsel %vm73, %v72, %v70
  %75 = vrot.lane.b32.xlu0 %v74, 40
  %v76 = vpop.permute.xlu0 %75
  %vm77 = vcmask 392512
  %s78 = scalar_lea.vmem %s1, 8
  %79 = vst.msk [vmem:[%s78] sm:$0xff] %vm77, %v76
  %s80 = scalar_lea.vmem %s0, 4
  %v81 = vld [vmem:[%s80] ss:$8 sm:$0xf]
  %s82 = scalar_lea.vmem %s0, 4
  %v83 = vld [vmem:[%s82] ss:$8 sm:$0xf0]
  %vm84 = vcmask 1047556
  %v85 = vsel %vm84, %v83, %v81
  %86 = vrot.lane.b32.xlu0 %v85, 32
  %v87 = vpop.permute.xlu0 %86
  %vm88 = vcmask 326912
  %89 = vst.msk [vmem:[%s1] sm:$0xff] %vm88, %v87
  %s90 = scalar_lea.vmem %s0, 68
  %v91 = vld [vmem:[%s90] ss:$8 sm:$0xf]
  %s92 = scalar_lea.vmem %s0, 68
  %v93 = vld [vmem:[%s92] ss:$8 sm:$0xf0]
  %vm94 = vcmask 1047556
  %v95 = vsel %vm94, %v93, %v91
  %96 = vrot.lane.b32.xlu0 %v95, 32
  %v97 = vpop.permute.xlu0 %96
  %vm98 = vcmask 326912
  %s99 = scalar_lea.vmem %s1, 8
  %100 = vst.msk [vmem:[%s99] sm:$0xff] %vm98, %v97
  %s101 = scalar_lea.vmem %s0, 3
  %v102 = vld [vmem:[%s101] ss:$8 sm:$0xf]
  %s103 = scalar_lea.vmem %s0, 3
  %v104 = vld [vmem:[%s103] ss:$8 sm:$0xf0]
  %vm105 = vcmask 1047556
  %v106 = vsel %vm105, %v104, %v102
  %107 = vrot.lane.b32.xlu0 %v106, 24
  %v108 = vpop.permute.xlu0 %107
  %vm109 = vcmask 261312
  %110 = vst.msk [vmem:[%s1] sm:$0xff] %vm109, %v108
  %s111 = scalar_lea.vmem %s0, 67
  %v112 = vld [vmem:[%s111] ss:$8 sm:$0xf]
  %s113 = scalar_lea.vmem %s0, 67
  %v114 = vld [vmem:[%s113] ss:$8 sm:$0xf0]
  %vm115 = vcmask 1047556
  %v116 = vsel %vm115, %v114, %v112
  %117 = vrot.lane.b32.xlu0 %v116, 24
  %v118 = vpop.permute.xlu0 %117
  %vm119 = vcmask 261312
  %s120 = scalar_lea.vmem %s1, 8
  %121 = vst.msk [vmem:[%s120] sm:$0xff] %vm119, %v118
  %s122 = scalar_lea.vmem %s0, 2
  %v123 = vld [vmem:[%s122] ss:$8 sm:$0xf]
  %s124 = scalar_lea.vmem %s0, 2
  %v125 = vld [vmem:[%s124] ss:$8 sm:$0xf0]
  %vm126 = vcmask 1047556
  %v127 = vsel %vm126, %v125, %v123
  %128 = vrot.lane.b32.xlu0 %v127, 16
  %v129 = vpop.permute.xlu0 %128
  %vm130 = vcmask 195712
  %131 = vst.msk [vmem:[%s1] sm:$0xff] %vm130, %v129
  %s132 = scalar_lea.vmem %s0, 66
  %v133 = vld [vmem:[%s132] ss:$8 sm:$0xf]
  %s134 = scalar_lea.vmem %s0, 66
  %v135 = vld [vmem:[%s134] ss:$8 sm:$0xf0]
  %vm136 = vcmask 1047556
  %v137 = vsel %vm136, %v135, %v133
  %138 = vrot.lane.b32.xlu0 %v137, 16
  %v139 = vpop.permute.xlu0 %138
  %vm140 = vcmask 195712
  %s141 = scalar_lea.vmem %s1, 8
  %142 = vst.msk [vmem:[%s141] sm:$0xff] %vm140, %v139
  %s143 = scalar_lea.vmem %s0, 1
  %v144 = vld [vmem:[%s143] ss:$8 sm:$0xf]
  %s145 = scalar_lea.vmem %s0, 1
  %v146 = vld [vmem:[%s145] ss:$8 sm:$0xf0]
  %vm147 = vcmask 1047556
  %v148 = vsel %vm147, %v146, %v144
  %149 = vrot.lane.b32.xlu0 %v148, 8
  %v150 = vpop.permute.xlu0 %149
  %vm151 = vcmask 130112
  %152 = vst.msk [vmem:[%s1] sm:$0xff] %vm151, %v150
  %s153 = scalar_lea.vmem %s0, 65
  %v154 = vld [vmem:[%s153] ss:$8 sm:$0xf]
  %s155 = scalar_lea.vmem %s0, 65
  %v156 = vld [vmem:[%s155] ss:$8 sm:$0xf0]
  %vm157 = vcmask 1047556
  %v158 = vsel %vm157, %v156, %v154
  %159 = vrot.lane.b32.xlu0 %v158, 8
  %v160 = vpop.permute.xlu0 %159
  %vm161 = vcmask 130112
  %s162 = scalar_lea.vmem %s1, 8
  %163 = vst.msk [vmem:[%s162] sm:$0xff] %vm161, %v160

// kernel: tile.13
$region0: #{tile.13}
  %s0 = inlined_call_operand.vmem [shape: f32[2,4,4,16], index: 0, kind: input, shape index: {}]
  %s1 = inlined_call_operand.vmem [shape: f32[8,64], index: 1, kind: output, shape index: {}]
  $region1: #{tile.13} parent=0
    #allocation0 [shape = 'u8[32768]{0}', space=vmem, size = 0x8000, scoped, tag = 'scoped mem for input reshape']
    %s3 = sshllo.u32 0, 4
    %s4 = smul.addr 4, 7
    %s5 = scalar_lea.vmem %s0, %s4
    %v6 = vld [vmem:[%s5] sm:%s3]
    %s7 = scalar_lea.vmem [#allocation0], 56
    %8 = vst [vmem:[%s7] sm:%s3] %v6
    %s9 = smul.addr 4, 6
    %s10 = scalar_lea.vmem %s0, %s9
    %v11 = vld [vmem:[%s10] sm:%s3]
    %s12 = scalar_lea.vmem [#allocation0], 48
    %13 = vst [vmem:[%s12] sm:%s3] %v11
    %s14 = smul.addr 4, 5
    %s15 = scalar_lea.vmem %s0, %s14
    %v16 = vld [vmem:[%s15] sm:%s3]
    %s17 = scalar_lea.vmem [#allocation0], 40
    %18 = vst [vmem:[%s17] sm:%s3] %v16
    %s19 = smul.addr 4, 4
    %s20 = scalar_lea.vmem %s0, %s19
    %v21 = vld [vmem:[%s20] sm:%s3]
    %s22 = scalar_lea.vmem [#allocation0], 32
    %23 = vst [vmem:[%s22] sm:%s3] %v21
    %s24 = smul.addr 4, 3
    %s25 = scalar_lea.vmem %s0, %s24
    %v26 = vld [vmem:[%s25] sm:%s3]
    %s27 = scalar_lea.vmem [#allocation0], 24
    %28 = vst [vmem:[%s27] sm:%s3] %v26
    %s29 = smul.addr 4, 2
    %s30 = scalar_lea.vmem %s0, %s29
    %v31 = vld [vmem:[%s30] sm:%s3]
    %s32 = scalar_lea.vmem [#allocation0], 16
    %33 = vst [vmem:[%s32] sm:%s3] %v31
    %s34 = scalar_lea.vmem %s0, 4
    %v35 = vld [vmem:[%s34] sm:%s3]
    %s36 = scalar_lea.vmem [#allocation0], 8
    %37 = vst [vmem:[%s36] sm:%s3] %v35
    %v38 = vld [vmem:[%s0] sm:%s3]
    %39 = vst [vmem:[#allocation0] sm:%s3] %v38
    %v40 = vld [vmem:[#allocation0] ss:$8 sm:$0xf]
    %v41 = vld [vmem:[#allocation0] ss:$8 sm:$0xf0]
    %vm42 = vcmask 1047556
    %v43 = vsel %vm42, %v41, %v40
    %vm44 = vcmask 130048
    %45 = vst.msk [vmem:[%s1] sm:$0xff] %vm44, %v43
    %s46 = scalar_lea.vmem [#allocation0], 3
    %v47 = vld [vmem:[%s46] ss:$8 sm:$0xf]
    %s48 = scalar_lea.vmem [#allocation0], 3
    %v49 = vld [vmem:[%s48] ss:$8 sm:$0xf0]
    %vm50 = vcmask 1047556
    %v51 = vsel %vm50, %v49, %v47
    %52 = vrot.lane.b32.xlu0 %v51, 48
    %v53 = vpop.permute.xlu0 %52
    %vm54 = vcmask 523648
    %55 = vst.msk [vmem:[%s1] sm:$0xff] %vm54, %v53
    %s56 = scalar_lea.vmem [#allocation0], 2
    %v57 = vld [vmem:[%s56] ss:$8 sm:$0xf]
    %s58 = scalar_lea.vmem [#allocation0], 2
    %v59 = vld [vmem:[%s58] ss:$8 sm:$0xf0]
    %vm60 = vcmask 1047556
    %v61 = vsel %vm60, %v59, %v57
    %62 = vrot.lane.b32.xlu0 %v61, 32
    %v63 = vpop.permute.xlu0 %62
    %vm64 = vcmask 392448
    %65 = vst.msk [vmem:[%s1] sm:$0xff] %vm64, %v63
    %s66 = scalar_lea.vmem [#allocation0], 1
    %v67 = vld [vmem:[%s66] ss:$8 sm:$0xf]
    %s68 = scalar_lea.vmem [#allocation0], 1
    %v69 = vld [vmem:[%s68] ss:$8 sm:$0xf0]
    %vm70 = vcmask 1047556
    %v71 = vsel %vm70, %v69, %v67
    %72 = vrot.lane.b32.xlu0 %v71, 16
    %v73 = vpop.permute.xlu0 %72
    %vm74 = vcmask 261248
    %75 = vst.msk [vmem:[%s1] sm:$0xff] %vm74, %v73

// kernel: tile.14
$region0: #{tile.14}
  #allocation0 [shape = 's32[1]{0}', space=sflag, size = 0x4, scoped, tag = 'scoped memory for tile.14']
  %s0 = inlined_call_operand.vmem [shape: f32[8,64], index: 0, kind: input, shape index: {}]
  %s1 = inlined_call_operand.vmem [shape: f32[2,8,2,64], index: 1, kind: output, shape index: {}]
  // Predicated region
  $region2: #{tile.14} parent=0 // pred_check
    _
  $region3: #{tile.14} parent=0 // pred_check_branch
    %3 = sbr.rel (0) target = $region5
  $region4: #{tile.14} parent=0 // pred_region
    _
  $region5: #{tile.14} parent=0 // pred_fallthru
    _
  %v4 = vld [vmem:[%s0] ss:$0 sm:$0xff]
  %5 = vst [vmem:[%s1] sm:$0x3] %v4
  %s6 = scalar_lea.vmem %s1, 16
  %7 = vst [vmem:[%s6] sm:$0x3] %v4
  %s8 = scalar_lea.vmem %s0, 1
  %v9 = vld [vmem:[%s8] ss:$0 sm:$0xff]
  %s10 = scalar_lea.vmem %s1, 2
  %11 = vst [vmem:[%s10] sm:$0x3] %v9
  %s12 = scalar_lea.vmem %s1, 18
  %13 = vst [vmem:[%s12] sm:$0x3] %v9
  %s14 = scalar_lea.vmem %s0, 2
  %v15 = vld [vmem:[%s14] ss:$0 sm:$0xff]
  %s16 = scalar_lea.vmem %s1, 4
  %17 = vst [vmem:[%s16] sm:$0x3] %v15
  %s18 = scalar_lea.vmem %s1, 20
  %19 = vst [vmem:[%s18] sm:$0x3] %v15
  %s20 = scalar_lea.vmem %s0, 3
  %v21 = vld [vmem:[%s20] ss:$0 sm:$0xff]
  %s22 = scalar_lea.vmem %s1, 6
  %23 = vst [vmem:[%s22] sm:$0x3] %v21
  %s24 = scalar_lea.vmem %s1, 22
  %25 = vst [vmem:[%s24] sm:$0x3] %v21
  %s26 = scalar_lea.vmem %s0, 4
  %v27 = vld [vmem:[%s26] ss:$0 sm:$0xff]
  %s28 = scalar_lea.vmem %s1, 8
  %29 = vst [vmem:[%s28] sm:$0x3] %v27
  %s30 = scalar_lea.vmem %s1, 24
  %31 = vst [vmem:[%s30] sm:$0x3] %v27
  %s32 = scalar_lea.vmem %s0, 5
  %v33 = vld [vmem:[%s32] ss:$0 sm:$0xff]
  %s34 = scalar_lea.vmem %s1, 10
  %35 = vst [vmem:[%s34] sm:$0x3] %v33
  %s36 = scalar_lea.vmem %s1, 26
  %37 = vst [vmem:[%s36] sm:$0x3] %v33
  %s38 = scalar_lea.vmem %s0, 6
  %v39 = vld [vmem:[%s38] ss:$0 sm:$0xff]
  %s40 = scalar_lea.vmem %s1, 12
  %41 = vst [vmem:[%s40] sm:$0x3] %v39
  %s42 = scalar_lea.vmem %s1, 28
  %43 = vst [vmem:[%s42] sm:$0x3] %v39
  %s44 = scalar_lea.vmem %s0, 7
  %v45 = vld [vmem:[%s44] ss:$0 sm:$0xff]
  %s46 = scalar_lea.vmem %s1, 14
  %47 = vst [vmem:[%s46] sm:$0x3] %v45
  %s48 = scalar_lea.vmem %s1, 30
  %49 = vst [vmem:[%s48] sm:$0x3] %v45

// kernel: tile.15
$region0: #{tile.15}
  %s0 = inlined_call_operand.vmem [shape: f32[2,8,2,64], index: 0, kind: input, shape index: {}]
  %s1 = inlined_call_operand.vmem [shape: f32[16,128], index: 1, kind: output, shape index: {}]
  $region1: #{tile.15} parent=0
    #allocation0 [shape = 'u8[65536]{0}', space=vmem, size = 0x10000, scoped, tag = 'scoped mem for input reshape']
    %s3 = sshllo.u32 0, 2
    %s4 = smul.addr 2, 15
    %s5 = scalar_lea.vmem %s0, %s4
    %v6 = vld [vmem:[%s5] sm:%s3]
    %s7 = scalar_lea.vmem [#allocation0], 120
    %8 = vst [vmem:[%s7] sm:%s3] %v6
    %s9 = smul.addr 2, 14
    %s10 = scalar_lea.vmem %s0, %s9
    %v11 = vld [vmem:[%s10] sm:%s3]
    %s12 = scalar_lea.vmem [#allocation0], 112
    %13 = vst [vmem:[%s12] sm:%s3] %v11
    %s14 = smul.addr 2, 13
    %s15 = scalar_lea.vmem %s0, %s14
    %v16 = vld [vmem:[%s15] sm:%s3]
    %s17 = scalar_lea.vmem [#allocation0], 104
    %18 = vst [vmem:[%s17] sm:%s3] %v16
    %s19 = smul.addr 2, 12
    %s20 = scalar_lea.vmem %s0, %s19
    %v21 = vld [vmem:[%s20] sm:%s3]
    %s22 = scalar_lea.vmem [#allocation0], 96
    %23 = vst [vmem:[%s22] sm:%s3] %v21
    %s24 = smul.addr 2, 11
    %s25 = scalar_lea.vmem %s0, %s24
    %v26 = vld [vmem:[%s25] sm:%s3]
    %s27 = scalar_lea.vmem [#allocation0], 88
    %28 = vst [vmem:[%s27] sm:%s3] %v26
    %s29 = smul.addr 2, 10
    %s30 = scalar_lea.vmem %s0, %s29
    %v31 = vld [vmem:[%s30] sm:%s3]
    %s32 = scalar_lea.vmem [#allocation0], 80
    %33 = vst [vmem:[%s32] sm:%s3] %v31
    %s34 = smul.addr 2, 9
    %s35 = scalar_lea.vmem %s0, %s34
    %v36 = vld [vmem:[%s35] sm:%s3]
    %s37 = scalar_lea.vmem [#allocation0], 72
    %38 = vst [vmem:[%s37] sm:%s3] %v36
    %s39 = smul.addr 2, 8
    %s40 = scalar_lea.vmem %s0, %s39
    %v41 = vld [vmem:[%s40] sm:%s3]
    %s42 = scalar_lea.vmem [#allocation0], 64
    %43 = vst [vmem:[%s42] sm:%s3] %v41
    %s44 = smul.addr 2, 7
    %s45 = scalar_lea.vmem %s0, %s44
    %v46 = vld [vmem:[%s45] sm:%s3]
    %s47 = scalar_lea.vmem [#allocation0], 56
    %48 = vst [vmem:[%s47] sm:%s3] %v46
    %s49 = smul.addr 2, 6
    %s50 = scalar_lea.vmem %s0, %s49
    %v51 = vld [vmem:[%s50] sm:%s3]
    %s52 = scalar_lea.vmem [#allocation0], 48
    %53 = vst [vmem:[%s52] sm:%s3] %v51
    %s54 = smul.addr 2, 5
    %s55 = scalar_lea.vmem %s0, %s54
    %v56 = vld [vmem:[%s55] sm:%s3]
    %s57 = scalar_lea.vmem [#allocation0], 40
    %58 = vst [vmem:[%s57] sm:%s3] %v56
    %s59 = smul.addr 2, 4
    %s60 = scalar_lea.vmem %s0, %s59
    %v61 = vld [vmem:[%s60] sm:%s3]
    %s62 = scalar_lea.vmem [#allocation0], 32
    %63 = vst [vmem:[%s62] sm:%s3] %v61
    %s64 = smul.addr 2, 3
    %s65 = scalar_lea.vmem %s0, %s64
    %v66 = vld [vmem:[%s65] sm:%s3]
    %s67 = scalar_lea.vmem [#allocation0], 24
    %68 = vst [vmem:[%s67] sm:%s3] %v66
    %s69 = smul.addr 2, 2
    %s70 = scalar_lea.vmem %s0, %s69
    %v71 = vld [vmem:[%s70] sm:%s3]
    %s72 = scalar_lea.vmem [#allocation0], 16
    %73 = vst [vmem:[%s72] sm:%s3] %v71
    %s74 = scalar_lea.vmem %s0, 2
    %v75 = vld [vmem:[%s74] sm:%s3]
    %s76 = scalar_lea.vmem [#allocation0], 8
    %77 = vst [vmem:[%s76] sm:%s3] %v75
    %v78 = vld [vmem:[%s0] sm:%s3]
    %79 = vst [vmem:[#allocation0] sm:%s3] %v78
    %v80 = vld [vmem:[#allocation0] ss:$8 sm:$0xf]
    %v81 = vld [vmem:[#allocation0] ss:$8 sm:$0xf0]
    %vm82 = vcmask 1047556
    %v83 = vsel %vm82, %v81, %v80
    %vm84 = vcmask 523264
    %85 = vst.msk [vmem:[%s1] sm:$0xff] %vm84, %v83
    %s86 = scalar_lea.vmem [#allocation0], 64
    %v87 = vld [vmem:[%s86] ss:$8 sm:$0xf]
    %s88 = scalar_lea.vmem [#allocation0], 64
    %v89 = vld [vmem:[%s88] ss:$8 sm:$0xf0]
    %vm90 = vcmask 1047556
    %v91 = vsel %vm90, %v89, %v87
    %vm92 = vcmask 523264
    %s93 = scalar_lea.vmem %s1, 8
    %94 = vst.msk [vmem:[%s93] sm:$0xff] %vm92, %v91
    %s95 = scalar_lea.vmem [#allocation0], 1
    %v96 = vld [vmem:[%s95] ss:$8 sm:$0xf]
    %s97 = scalar_lea.vmem [#allocation0], 1
    %v98 = vld [vmem:[%s97] ss:$8 sm:$0xf0]
    %vm99 = vcmask 1047556
    %v100 = vsel %vm99, %v98, %v96
    %101 = vrot.lane.b32.xlu0 %v100, 64
    %v102 = vpop.permute.xlu0 %101
    %vm103 = vcmask 1048064
    %104 = vst.msk [vmem:[%s1] sm:$0xff] %vm103, %v102
    %s105 = scalar_lea.vmem [#allocation0], 65
    %v106 = vld [vmem:[%s105] ss:$8 sm:$0xf]
    %s107 = scalar_lea.vmem [#allocation0], 65
    %v108 = vld [vmem:[%s107] ss:$8 sm:$0xf0]
    %vm109 = vcmask 1047556
    %v110 = vsel %vm109, %v108, %v106
    %111 = vrot.lane.b32.xlu0 %v110, 64
    %v112 = vpop.permute.xlu0 %111
    %vm113 = vcmask 1048064
    %s114 = scalar_lea.vmem %s1, 8
    %115 = vst.msk [vmem:[%s114] sm:$0xff] %vm113, %v112

// kernel: tile.17
$region0: #{tile.17}
  %s0 = inlined_call_operand.vmem [shape: s32[2,4,4,16], index: 0, kind: input, shape index: {}]
  %s1 = inlined_call_operand.vmem [shape: s32[8,64], index: 1, kind: output, shape index: {}]
  $region1: #{tile.17} parent=0
    #allocation0 [shape = 'u8[32768]{0}', space=vmem, size = 0x8000, scoped, tag = 'scoped mem for input reshape']
    %s3 = sshllo.u32 0, 4
    %s4 = smul.addr 4, 7
    %s5 = scalar_lea.vmem %s0, %s4
    %v6 = vld [vmem:[%s5] sm:%s3]
    %s7 = scalar_lea.vmem [#allocation0], 56
    %8 = vst [vmem:[%s7] sm:%s3] %v6
    %s9 = smul.addr 4, 6
    %s10 = scalar_lea.vmem %s0, %s9
    %v11 = vld [vmem:[%s10] sm:%s3]
    %s12 = scalar_lea.vmem [#allocation0], 48
    %13 = vst [vmem:[%s12] sm:%s3] %v11
    %s14 = smul.addr 4, 5
    %s15 = scalar_lea.vmem %s0, %s14
    %v16 = vld [vmem:[%s15] sm:%s3]
    %s17 = scalar_lea.vmem [#allocation0], 40
    %18 = vst [vmem:[%s17] sm:%s3] %v16
    %s19 = smul.addr 4, 4
    %s20 = scalar_lea.vmem %s0, %s19
    %v21 = vld [vmem:[%s20] sm:%s3]
    %s22 = scalar_lea.vmem [#allocation0], 32
    %23 = vst [vmem:[%s22] sm:%s3] %v21
    %s24 = smul.addr 4, 3
    %s25 = scalar_lea.vmem %s0, %s24
    %v26 = vld [vmem:[%s25] sm:%s3]
    %s27 = scalar_lea.vmem [#allocation0], 24
    %28 = vst [vmem:[%s27] sm:%s3] %v26
    %s29 = smul.addr 4, 2
    %s30 = scalar_lea.vmem %s0, %s29
    %v31 = vld [vmem:[%s30] sm:%s3]
    %s32 = scalar_lea.vmem [#allocation0], 16
    %33 = vst [vmem:[%s32] sm:%s3] %v31
    %s34 = scalar_lea.vmem %s0, 4
    %v35 = vld [vmem:[%s34] sm:%s3]
    %s36 = scalar_lea.vmem [#allocation0], 8
    %37 = vst [vmem:[%s36] sm:%s3] %v35
    %v38 = vld [vmem:[%s0] sm:%s3]
    %39 = vst [vmem:[#allocation0] sm:%s3] %v38
    %v40 = vld [vmem:[#allocation0] ss:$8 sm:$0xf]
    %v41 = vld [vmem:[#allocation0] ss:$8 sm:$0xf0]
    %vm42 = vcmask 1047556
    %v43 = vsel %vm42, %v41, %v40
    %vm44 = vcmask 130048
    %45 = vst.msk [vmem:[%s1] sm:$0xff] %vm44, %v43
    %s46 = scalar_lea.vmem [#allocation0], 3
    %v47 = vld [vmem:[%s46] ss:$8 sm:$0xf]
    %s48 = scalar_lea.vmem [#allocation0], 3
    %v49 = vld [vmem:[%s48] ss:$8 sm:$0xf0]
    %vm50 = vcmask 1047556
    %v51 = vsel %vm50, %v49, %v47
    %52 = vrot.lane.b32.xlu0 %v51, 48
    %v53 = vpop.permute.xlu0 %52
    %vm54 = vcmask 523648
    %55 = vst.msk [vmem:[%s1] sm:$0xff] %vm54, %v53
    %s56 = scalar_lea.vmem [#allocation0], 2
    %v57 = vld [vmem:[%s56] ss:$8 sm:$0xf]
    %s58 = scalar_lea.vmem [#allocation0], 2
    %v59 = vld [vmem:[%s58] ss:$8 sm:$0xf0]
    %vm60 = vcmask 1047556
    %v61 = vsel %vm60, %v59, %v57
    %62 = vrot.lane.b32.xlu0 %v61, 32
    %v63 = vpop.permute.xlu0 %62
    %vm64 = vcmask 392448
    %65 = vst.msk [vmem:[%s1] sm:$0xff] %vm64, %v63
    %s66 = scalar_lea.vmem [#allocation0], 1
    %v67 = vld [vmem:[%s66] ss:$8 sm:$0xf]
    %s68 = scalar_lea.vmem [#allocation0], 1
    %v69 = vld [vmem:[%s68] ss:$8 sm:$0xf0]
    %vm70 = vcmask 1047556
    %v71 = vsel %vm70, %v69, %v67
    %72 = vrot.lane.b32.xlu0 %v71, 16
    %v73 = vpop.permute.xlu0 %72
    %vm74 = vcmask 261248
    %75 = vst.msk [vmem:[%s1] sm:$0xff] %vm74, %v73

// kernel: tile.18
$region0: #{tile.18}
  #allocation0 [shape = 's32[1]{0}', space=sflag, size = 0x4, scoped, tag = 'scoped memory for tile.18']
  %s0 = inlined_call_operand.vmem [shape: s32[8,64], index: 0, kind: input, shape index: {}]
  %s1 = inlined_call_operand.vmem [shape: s32[2,8,2,64], index: 1, kind: output, shape index: {}]
  // Predicated region
  $region2: #{tile.18} parent=0 // pred_check
    _
  $region3: #{tile.18} parent=0 // pred_check_branch
    %3 = sbr.rel (0) target = $region5
  $region4: #{tile.18} parent=0 // pred_region
    _
  $region5: #{tile.18} parent=0 // pred_fallthru
    _
  %v4 = vld [vmem:[%s0] ss:$0 sm:$0xff]
  %5 = vst [vmem:[%s1] sm:$0x3] %v4
  %s6 = scalar_lea.vmem %s1, 16
  %7 = vst [vmem:[%s6] sm:$0x3] %v4
  %s8 = scalar_lea.vmem %s0, 1
  %v9 = vld [vmem:[%s8] ss:$0 sm:$0xff]
  %s10 = scalar_lea.vmem %s1, 2
  %11 = vst [vmem:[%s10] sm:$0x3] %v9
  %s12 = scalar_lea.vmem %s1, 18
  %13 = vst [vmem:[%s12] sm:$0x3] %v9
  %s14 = scalar_lea.vmem %s0, 2
  %v15 = vld [vmem:[%s14] ss:$0 sm:$0xff]
  %s16 = scalar_lea.vmem %s1, 4
  %17 = vst [vmem:[%s16] sm:$0x3] %v15
  %s18 = scalar_lea.vmem %s1, 20
  %19 = vst [vmem:[%s18] sm:$0x3] %v15
  %s20 = scalar_lea.vmem %s0, 3
  %v21 = vld [vmem:[%s20] ss:$0 sm:$0xff]
  %s22 = scalar_lea.vmem %s1, 6
  %23 = vst [vmem:[%s22] sm:$0x3] %v21
  %s24 = scalar_lea.vmem %s1, 22
  %25 = vst [vmem:[%s24] sm:$0x3] %v21
  %s26 = scalar_lea.vmem %s0, 4
  %v27 = vld [vmem:[%s26] ss:$0 sm:$0xff]
  %s28 = scalar_lea.vmem %s1, 8
  %29 = vst [vmem:[%s28] sm:$0x3] %v27
  %s30 = scalar_lea.vmem %s1, 24
  %31 = vst [vmem:[%s30] sm:$0x3] %v27
  %s32 = scalar_lea.vmem %s0, 5
  %v33 = vld [vmem:[%s32] ss:$0 sm:$0xff]
  %s34 = scalar_lea.vmem %s1, 10
  %35 = vst [vmem:[%s34] sm:$0x3] %v33
  %s36 = scalar_lea.vmem %s1, 26
  %37 = vst [vmem:[%s36] sm:$0x3] %v33
  %s38 = scalar_lea.vmem %s0, 6
  %v39 = vld [vmem:[%s38] ss:$0 sm:$0xff]
  %s40 = scalar_lea.vmem %s1, 12
  %41 = vst [vmem:[%s40] sm:$0x3] %v39
  %s42 = scalar_lea.vmem %s1, 28
  %43 = vst [vmem:[%s42] sm:$0x3] %v39
  %s44 = scalar_lea.vmem %s0, 7
  %v45 = vld [vmem:[%s44] ss:$0 sm:$0xff]
  %s46 = scalar_lea.vmem %s1, 14
  %47 = vst [vmem:[%s46] sm:$0x3] %v45
  %s48 = scalar_lea.vmem %s1, 30
  %49 = vst [vmem:[%s48] sm:$0x3] %v45

// kernel: tile.19
$region0: #{tile.19}
  %s0 = inlined_call_operand.vmem [shape: s32[2,8,2,64], index: 0, kind: input, shape index: {}]
  %s1 = inlined_call_operand.vmem [shape: s32[16,128], index: 1, kind: output, shape index: {}]
  $region1: #{tile.19} parent=0
    #allocation0 [shape = 'u8[65536]{0}', space=vmem, size = 0x10000, scoped, tag = 'scoped mem for input reshape']
    %s3 = sshllo.u32 0, 2
    %s4 = smul.addr 2, 15
    %s5 = scalar_lea.vmem %s0, %s4
    %v6 = vld [vmem:[%s5] sm:%s3]
    %s7 = scalar_lea.vmem [#allocation0], 120
    %8 = vst [vmem:[%s7] sm:%s3] %v6
    %s9 = smul.addr 2, 14
    %s10 = scalar_lea.vmem %s0, %s9
    %v11 = vld [vmem:[%s10] sm:%s3]
    %s12 = scalar_lea.vmem [#allocation0], 112
    %13 = vst [vmem:[%s12] sm:%s3] %v11
    %s14 = smul.addr 2, 13
    %s15 = scalar_lea.vmem %s0, %s14
    %v16 = vld [vmem:[%s15] sm:%s3]
    %s17 = scalar_lea.vmem [#allocation0], 104
    %18 = vst [vmem:[%s17] sm:%s3] %v16
    %s19 = smul.addr 2, 12
    %s20 = scalar_lea.vmem %s0, %s19
    %v21 = vld [vmem:[%s20] sm:%s3]
    %s22 = scalar_lea.vmem [#allocation0], 96
    %23 = vst [vmem:[%s22] sm:%s3] %v21
    %s24 = smul.addr 2, 11
    %s25 = scalar_lea.vmem %s0, %s24
    %v26 = vld [vmem:[%s25] sm:%s3]
    %s27 = scalar_lea.vmem [#allocation0], 88
    %28 = vst [vmem:[%s27] sm:%s3] %v26
    %s29 = smul.addr 2, 10
    %s30 = scalar_lea.vmem %s0, %s29
    %v31 = vld [vmem:[%s30] sm:%s3]
    %s32 = scalar_lea.vmem [#allocation0], 80
    %33 = vst [vmem:[%s32] sm:%s3] %v31
    %s34 = smul.addr 2, 9
    %s35 = scalar_lea.vmem %s0, %s34
    %v36 = vld [vmem:[%s35] sm:%s3]
    %s37 = scalar_lea.vmem [#allocation0], 72
    %38 = vst [vmem:[%s37] sm:%s3] %v36
    %s39 = smul.addr 2, 8
    %s40 = scalar_lea.vmem %s0, %s39
    %v41 = vld [vmem:[%s40] sm:%s3]
    %s42 = scalar_lea.vmem [#allocation0], 64
    %43 = vst [vmem:[%s42] sm:%s3] %v41
    %s44 = smul.addr 2, 7
    %s45 = scalar_lea.vmem %s0, %s44
    %v46 = vld [vmem:[%s45] sm:%s3]
    %s47 = scalar_lea.vmem [#allocation0], 56
    %48 = vst [vmem:[%s47] sm:%s3] %v46
    %s49 = smul.addr 2, 6
    %s50 = scalar_lea.vmem %s0, %s49
    %v51 = vld [vmem:[%s50] sm:%s3]
    %s52 = scalar_lea.vmem [#allocation0], 48
    %53 = vst [vmem:[%s52] sm:%s3] %v51
    %s54 = smul.addr 2, 5
    %s55 = scalar_lea.vmem %s0, %s54
    %v56 = vld [vmem:[%s55] sm:%s3]
    %s57 = scalar_lea.vmem [#allocation0], 40
    %58 = vst [vmem:[%s57] sm:%s3] %v56
    %s59 = smul.addr 2, 4
    %s60 = scalar_lea.vmem %s0, %s59
    %v61 = vld [vmem:[%s60] sm:%s3]
    %s62 = scalar_lea.vmem [#allocation0], 32
    %63 = vst [vmem:[%s62] sm:%s3] %v61
    %s64 = smul.addr 2, 3
    %s65 = scalar_lea.vmem %s0, %s64
    %v66 = vld [vmem:[%s65] sm:%s3]
    %s67 = scalar_lea.vmem [#allocation0], 24
    %68 = vst [vmem:[%s67] sm:%s3] %v66
    %s69 = smul.addr 2, 2
    %s70 = scalar_lea.vmem %s0, %s69
    %v71 = vld [vmem:[%s70] sm:%s3]
    %s72 = scalar_lea.vmem [#allocation0], 16
    %73 = vst [vmem:[%s72] sm:%s3] %v71
    %s74 = scalar_lea.vmem %s0, 2
    %v75 = vld [vmem:[%s74] sm:%s3]
    %s76 = scalar_lea.vmem [#allocation0], 8
    %77 = vst [vmem:[%s76] sm:%s3] %v75
    %v78 = vld [vmem:[%s0] sm:%s3]
    %79 = vst [vmem:[#allocation0] sm:%s3] %v78
    %v80 = vld [vmem:[#allocation0] ss:$8 sm:$0xf]
    %v81 = vld [vmem:[#allocation0] ss:$8 sm:$0xf0]
    %vm82 = vcmask 1047556
    %v83 = vsel %vm82, %v81, %v80
    %vm84 = vcmask 523264
    %85 = vst.msk [vmem:[%s1] sm:$0xff] %vm84, %v83
    %s86 = scalar_lea.vmem [#allocation0], 64
    %v87 = vld [vmem:[%s86] ss:$8 sm:$0xf]
    %s88 = scalar_lea.vmem [#allocation0], 64
    %v89 = vld [vmem:[%s88] ss:$8 sm:$0xf0]
    %vm90 = vcmask 1047556
    %v91 = vsel %vm90, %v89, %v87
    %vm92 = vcmask 523264
    %s93 = scalar_lea.vmem %s1, 8
    %94 = vst.msk [vmem:[%s93] sm:$0xff] %vm92, %v91
    %s95 = scalar_lea.vmem [#allocation0], 1
    %v96 = vld [vmem:[%s95] ss:$8 sm:$0xf]
    %s97 = scalar_lea.vmem [#allocation0], 1
    %v98 = vld [vmem:[%s97] ss:$8 sm:$0xf0]
    %vm99 = vcmask 1047556
    %v100 = vsel %vm99, %v98, %v96
    %101 = vrot.lane.b32.xlu0 %v100, 64
    %v102 = vpop.permute.xlu0 %101
    %vm103 = vcmask 1048064
    %104 = vst.msk [vmem:[%s1] sm:$0xff] %vm103, %v102
    %s105 = scalar_lea.vmem [#allocation0], 65
    %v106 = vld [vmem:[%s105] ss:$8 sm:$0xf]
    %s107 = scalar_lea.vmem [#allocation0], 65
    %v108 = vld [vmem:[%s107] ss:$8 sm:$0xf0]
    %vm109 = vcmask 1047556
    %v110 = vsel %vm109, %v108, %v106
    %111 = vrot.lane.b32.xlu0 %v110, 64
    %v112 = vpop.permute.xlu0 %111
    %vm113 = vcmask 1048064
    %s114 = scalar_lea.vmem %s1, 8
    %115 = vst.msk [vmem:[%s114] sm:$0xff] %vm113, %v112

// kernel: forward.1
$region0: #{forward.1}
  #allocation0 [shape = 'u32[]', space=smem, size = 0x4, offset = 0x4, fixed_abs, tag = 'smem constant byte address 0x4 - core index']
  #allocation1 [shape = 'u32[144,128]{1,0:T(1,128)}', space=vmem, size = 0x12000, scoped, tag = 'internal scratch']
  #allocation2 [shape = 'f32[1,1]{1,0:T(1,128)S(1)}', space=vmem, size = 0x200, scoped, tag = 'scoped memory for forward.1']
  %s0 = inlined_call_operand.vmem [shape: f32[16,128], index: 0, kind: input, shape index: {}]
  %s1 = inlined_call_operand.vmem [shape: s32[16,128], index: 1, kind: input, shape index: {}]
  %s2 = inlined_call_operand.vmem [shape: s32[32,128], index: 2, kind: input, shape index: {}]
  %s3 = inlined_call_operand.vmem [shape: s32[16,128], index: 3, kind: input, shape index: {}]
  %s4 = inlined_call_operand.vmem [shape: s32[32,128], index: 4, kind: input, shape index: {}]
  %s5 = inlined_call_operand.vmem [shape: bf16[128,128], index: 5, kind: input, shape index: {}]
  %s6 = inlined_call_operand.vmem [shape: bf16[16,16], index: 6, kind: input, shape index: {}]
  %s7 = inlined_call_operand.vmem [shape: bf16[16,16], index: 7, kind: input, shape index: {}]
  %s8 = inlined_call_operand.vmem [shape: bf16[16,16], index: 8, kind: input, shape index: {}]
  %s9 = inlined_call_operand.vmem [shape: bf16[384,128], index: 9, kind: input, shape index: {}]
  %s10 = inlined_call_operand.vmem [shape: f32[1,128], index: 10, kind: input, shape index: {}]
  %s11 = inlined_call_operand.vmem [shape: f32[1,8], index: 11, kind: input, shape index: {}]
  %s12 = inlined_call_operand.vmem [shape: f32[1,8], index: 12, kind: input, shape index: {}]
  %s13 = inlined_call_operand.vmem [shape: bf16[128,8], index: 13, kind: input, shape index: {}]
  %s14 = inlined_call_operand.vmem [shape: bf16[2,32], index: 14, kind: input, shape index: {}, may-alias: {14,25}]
  %s15 = inlined_call_operand.vmem [shape: bf16[8,128], index: 15, kind: input, shape index: {}]
  %s16 = inlined_call_operand.vmem [shape: bf16[128,128], index: 16, kind: input, shape index: {}]
  %s17 = inlined_call_operand.vmem [shape: bf16[32,32], index: 17, kind: input, shape index: {}]
  %s18 = inlined_call_operand.vmem [shape: bf16[32,32], index: 18, kind: input, shape index: {}]
  %s19 = inlined_call_operand.vmem [shape: bf16[32,32], index: 19, kind: input, shape index: {}]
  %s20 = inlined_call_operand.vmem [shape: bf16[384,48], index: 20, kind: input, shape index: {}]
  %s21 = inlined_call_operand.vmem [shape: f32[1,48], index: 21, kind: input, shape index: {}]
  %s22 = inlined_call_operand.vmem [shape: f32[1,48], index: 22, kind: input, shape index: {}]
  %s23 = inlined_call_operand.<no memory space> [shape: f32[1,1], index: 23, kind: input, shape index: {}]
  %s24 = inlined_call_operand.vmem [shape: bf16[32,16], index: 24, kind: input, shape index: {}]
  %s25 = inlined_call_operand.vmem [shape: bf16[2,32], index: 25, kind: input, shape index: {}, may-alias: {14,25}]
  %s26 = inlined_call_operand.hbm [shape: f32[2,16], index: 26, kind: output, shape index: {}]
  %s27 = sld [smem:[#allocation0]]
  $region114: #{forward.1} parent=0
    _
  %s29 = ssub.s32 1, %s27
  %s30 = scalar_select 0, %s29, %s27
  %v31 = vstv %s23
  %32 = vst [vmem:[#allocation2] sm:$0x1] %v31
  $region1: #{forward.1} parent=0
    #allocation3 [shape = 'u8[1024]{0}', space=vmem, size = 0x400, scoped, tag = 'output window, operand 0, single buffered']
    #allocation4 [shape = 's32[1]{0}', space=sflag, size = 0x4, scoped, tag = 'scoped memory for forward.1']
    %33 = vsyncpa [#allocation4], 0
    // Predicated region
    $region2: #{forward.1} parent=1 // pred_check
      _
    $region3: #{forward.1} parent=1 // pred_check_branch
      %35 = sbr.rel (0) target = $region5
    $region4: #{forward.1} parent=1 // pred_region
      _
    $region5: #{forward.1} parent=1 // pred_fallthru
      _
    // Predicated region
    $region6: #{forward.1} parent=1 // pred_check
      _
    $region7: #{forward.1} parent=1 // pred_check_branch
      %37 = sbr.rel (0) target = $region9
    $region8: #{forward.1} parent=1 // pred_region
      _
    $region9: #{forward.1} parent=1 // pred_fallthru
      _
    // Predicated region
    $region10: #{forward.1} parent=1 // pred_check
      _
    $region11: #{forward.1} parent=1 // pred_check_branch
      %39 = sbr.rel (0) target = $region13
    $region12: #{forward.1} parent=1 // pred_region
      _
    $region13: #{forward.1} parent=1 // pred_fallthru
      _
    // Predicated region
    $region14: #{forward.1} parent=1 // pred_check
      _
    $region15: #{forward.1} parent=1 // pred_check_branch
      %41 = sbr.rel (0) target = $region17
    $region16: #{forward.1} parent=1 // pred_region
      _
    $region17: #{forward.1} parent=1 // pred_fallthru
      _
    // Predicated region
    $region18: #{forward.1} parent=1 // pred_check
      _
    $region19: #{forward.1} parent=1 // pred_check_branch
      %43 = sbr.rel (0) target = $region21
    $region20: #{forward.1} parent=1 // pred_region
      _
    $region21: #{forward.1} parent=1 // pred_fallthru
      _
    // Predicated region
    $region22: #{forward.1} parent=1 // pred_check
      _
    $region23: #{forward.1} parent=1 // pred_check_branch
      %45 = sbr.rel (0) target = $region25
    $region24: #{forward.1} parent=1 // pred_region
      _
    $region25: #{forward.1} parent=1 // pred_fallthru
      _
    // Predicated region
    $region26: #{forward.1} parent=1 // pred_check
      _
    $region27: #{forward.1} parent=1 // pred_check_branch
      %47 = sbr.rel (0) target = $region29
    $region28: #{forward.1} parent=1 // pred_region
      _
    $region29: #{forward.1} parent=1 // pred_fallthru
      _
    // Predicated region
    $region30: #{forward.1} parent=1 // pred_check
      _
    $region31: #{forward.1} parent=1 // pred_check_branch
      %49 = sbr.rel (0) target = $region33
    $region32: #{forward.1} parent=1 // pred_region
      _
    $region33: #{forward.1} parent=1 // pred_fallthru
      _
    // Predicated region
    $region34: #{forward.1} parent=1 // pred_check
      _
    $region35: #{forward.1} parent=1 // pred_check_branch
      %51 = sbr.rel (0) target = $region37
    $region36: #{forward.1} parent=1 // pred_region
      _
    $region37: #{forward.1} parent=1 // pred_fallthru
      _
    // Predicated region
    $region38: #{forward.1} parent=1 // pred_check
      _
    $region39: #{forward.1} parent=1 // pred_check_branch
      %53 = sbr.rel (0) target = $region41
    $region40: #{forward.1} parent=1 // pred_region
      _
    $region41: #{forward.1} parent=1 // pred_fallthru
      _
    // Predicated region
    $region42: #{forward.1} parent=1 // pred_check
      _
    $region43: #{forward.1} parent=1 // pred_check_branch
      %55 = sbr.rel (0) target = $region45
    $region44: #{forward.1} parent=1 // pred_region
      _
    $region45: #{forward.1} parent=1 // pred_fallthru
      _
    // Predicated region
    $region46: #{forward.1} parent=1 // pred_check
      _
    $region47: #{forward.1} parent=1 // pred_check_branch
      %57 = sbr.rel (0) target = $region49
    $region48: #{forward.1} parent=1 // pred_region
      _
    $region49: #{forward.1} parent=1 // pred_fallthru
      _
    // Predicated region
    $region50: #{forward.1} parent=1 // pred_check
      _
    $region51: #{forward.1} parent=1 // pred_check_branch
      %59 = sbr.rel (0) target = $region53
    $region52: #{forward.1} parent=1 // pred_region
      _
    $region53: #{forward.1} parent=1 // pred_fallthru
      _
    // Predicated region
    $region54: #{forward.1} parent=1 // pred_check
      _
    $region55: #{forward.1} parent=1 // pred_check_branch
      %61 = sbr.rel (0) target = $region57
    $region56: #{forward.1} parent=1 // pred_region
      _
    $region57: #{forward.1} parent=1 // pred_fallthru
      _
    // Predicated region
    $region58: #{forward.1} parent=1 // pred_check
      _
    $region59: #{forward.1} parent=1 // pred_check_branch
      %63 = sbr.rel (0) target = $region61
    $region60: #{forward.1} parent=1 // pred_region
      _
    $region61: #{forward.1} parent=1 // pred_fallthru
      _
    // Predicated region
    $region62: #{forward.1} parent=1 // pred_check
      _
    $region63: #{forward.1} parent=1 // pred_check_branch
      %65 = sbr.rel (0) target = $region65
    $region64: #{forward.1} parent=1 // pred_region
      _
    $region65: #{forward.1} parent=1 // pred_fallthru
      _
    // Predicated region
    $region66: #{forward.1} parent=1 // pred_check
      _
    $region67: #{forward.1} parent=1 // pred_check_branch
      %67 = sbr.rel (0) target = $region69
    $region68: #{forward.1} parent=1 // pred_region
      _
    $region69: #{forward.1} parent=1 // pred_fallthru
      _
    // Predicated region
    $region70: #{forward.1} parent=1 // pred_check
      _
    $region71: #{forward.1} parent=1 // pred_check_branch
      %69 = sbr.rel (0) target = $region73
    $region72: #{forward.1} parent=1 // pred_region
      _
    $region73: #{forward.1} parent=1 // pred_fallthru
      _
    // Predicated region
    $region74: #{forward.1} parent=1 // pred_check
      _
    $region75: #{forward.1} parent=1 // pred_check_branch
      %71 = sbr.rel (0) target = $region77
    $region76: #{forward.1} parent=1 // pred_region
      _
    $region77: #{forward.1} parent=1 // pred_fallthru
      _
    // Predicated region
    $region78: #{forward.1} parent=1 // pred_check
      _
    $region79: #{forward.1} parent=1 // pred_check_branch
      %73 = sbr.rel (0) target = $region81
    $region80: #{forward.1} parent=1 // pred_region
      _
    $region81: #{forward.1} parent=1 // pred_fallthru
      _
    // Predicated region
    $region82: #{forward.1} parent=1 // pred_check
      _
    $region83: #{forward.1} parent=1 // pred_check_branch
      %75 = sbr.rel (0) target = $region85
    $region84: #{forward.1} parent=1 // pred_region
      _
    $region85: #{forward.1} parent=1 // pred_fallthru
      _
    // Predicated region
    $region86: #{forward.1} parent=1 // pred_check
      _
    $region87: #{forward.1} parent=1 // pred_check_branch
      %77 = sbr.rel (0) target = $region89
    $region88: #{forward.1} parent=1 // pred_region
      _
    $region89: #{forward.1} parent=1 // pred_fallthru
      _
    // Predicated region
    $region90: #{forward.1} parent=1 // pred_check
      _
    $region91: #{forward.1} parent=1 // pred_check_branch
      %79 = sbr.rel (0) target = $region93
    $region92: #{forward.1} parent=1 // pred_region
      _
    $region93: #{forward.1} parent=1 // pred_fallthru
      _
    // Predicated region
    $region94: #{forward.1} parent=1 // pred_check
      _
    $region95: #{forward.1} parent=1 // pred_check_branch
      %81 = sbr.rel (0) target = $region97
    $region96: #{forward.1} parent=1 // pred_region
      _
    $region97: #{forward.1} parent=1 // pred_fallthru
      _
    // Predicated region
    $region98: #{forward.1} parent=1 // pred_check
      _
    $region99: #{forward.1} parent=1 // pred_check_branch
      %83 = sbr.rel (0) target = $region101
    $region100: #{forward.1} parent=1 // pred_region
      _
    $region101: #{forward.1} parent=1 // pred_fallthru
      _
    // Predicated region
    $region102: #{forward.1} parent=1 // pred_check
      _
    $region103: #{forward.1} parent=1 // pred_check_branch
      %85 = sbr.rel (0) target = $region105
    $region104: #{forward.1} parent=1 // pred_region
      _
    $region105: #{forward.1} parent=1 // pred_fallthru
      _
    %v87 = vld [vmem:[%s0] sm:$0xff]
    %v88 = vld [vmem:[%s0 + $0x8] sm:$0xff]
    %v89 = vld [vmem:[%s1] sm:$0xff]
    %v90 = vld [vmem:[%s1 + $0x8] sm:$0xff]
    %v91 = vld [vmem:[%s3] sm:$0xff]
    %v92 = vld [vmem:[%s3 + $0x8] sm:$0xff]
    %v93 = vld [vmem:[%s5] sm:$0xf]
    %v94 = vld [vmem:[%s5 + $0x4] sm:$0xf]
    %v95 = vld [vmem:[%s5 + $0x8] sm:$0xf]
    %v96 = vld [vmem:[%s5 + $0xc] sm:$0xf]
    %v97 = vld [vmem:[%s5 + $0x10] sm:$0xf]
    %v98 = vld [vmem:[%s5 + $0x14] sm:$0xf]
    %v99 = vld [vmem:[%s5 + $0x18] sm:$0xf]
    %v100 = vld [vmem:[%s5 + $0x1c] sm:$0xf]
    %v101 = vld [vmem:[%s5 + $0x20] sm:$0xf]
    %v102 = vld [vmem:[%s5 + $0x24] sm:$0xf]
    %v103 = vld [vmem:[%s5 + $0x28] sm:$0xf]
    %v104 = vld [vmem:[%s5 + $0x2c] sm:$0xf]
    %v105 = vld [vmem:[%s5 + $0x30] sm:$0xf]
    %v106 = vld [vmem:[%s5 + $0x34] sm:$0xf]
    %v107 = vld [vmem:[%s5 + $0x38] sm:$0xf]
    %v108 = vld [vmem:[%s5 + $0x3c] sm:$0xf]
    %v109 = vld [vmem:[%s6] sm:$0xf]
    %v110 = vld [vmem:[%s6 + $0x4] sm:$0xf]
    %vm111 = vcmp.eq.s32.totalorder %v89, %v91
    %vm112 = vcmp.eq.s32.totalorder %v90, %v92
    %v113 = vsel %vm111, %v87, 0.0
    %v114 = vsel %vm112, %v88, 0.0
    %v115 = vpack.c.bf16 %v114, %v113
    %v132 = vunpack.c.l.b16 %v93
    %v133 = vunpack.c.l.b16 %v94
    %v134 = vunpack.c.l.b16 %v95
    %v135 = vunpack.c.l.b16 %v96
    %v136 = vunpack.c.l.b16 %v97
    %v137 = vunpack.c.l.b16 %v98
    %v138 = vunpack.c.l.b16 %v99
    %v139 = vunpack.c.l.b16 %v100
    %v140 = vunpack.c.l.b16 %v101
    %v141 = vunpack.c.l.b16 %v102
    %v142 = vunpack.c.l.b16 %v103
    %v143 = vunpack.c.l.b16 %v104
    %v144 = vunpack.c.l.b16 %v105
    %v145 = vunpack.c.l.b16 %v106
    %v146 = vunpack.c.l.b16 %v107
    %v147 = vunpack.c.l.b16 %v108
    %v148 = vpack.c.b16 %v133, %v132
    %v149 = vpack.c.b16 %v135, %v134
    %v150 = vpack.c.b16 %v137, %v136
    %v151 = vpack.c.b16 %v139, %v138
    %v152 = vpack.c.b16 %v141, %v140
    %v153 = vpack.c.b16 %v143, %v142
    %v154 = vpack.c.b16 %v145, %v144
    %v155 = vpack.c.b16 %v147, %v146
    %164 = vmatprep.subr.bf16.mxu0 0
    %165 = vmatpush1.bf16.msra.mxu0 %v148
    %166 = vmatprep.subr.bf16.mxu0 0
    %167 = vmatpush1.bf16.msra.mxu0 %v149
    %168 = vmatprep.subr.bf16.mxu0 0
    %169 = vmatpush1.bf16.msra.mxu0 %v150
    %170 = vmatprep.subr.bf16.mxu0 0
    %171 = vmatpush1.bf16.msra.mxu0 %v151
    %172 = vmatprep.subr.bf16.mxu0 0
    %173 = vmatpush1.bf16.msra.mxu0 %v152
    %174 = vmatprep.subr.bf16.mxu0 0
    %175 = vmatpush1.bf16.msra.mxu0 %v153
    %176 = vmatprep.subr.bf16.mxu0 0
    %177 = vmatpush1.bf16.msra.mxu0 %v154
    %178 = vmatprep.subr.bf16.mxu0 0
    %179 = vmatpush1.bf16.msra.mxu0 %v155
    %180 = vmatprep.subr.bf16.mxu0 0
    %181 = vmatpush1.bf16.msra.mxu0 0
    %182 = vmatprep.subr.bf16.mxu0 0
    %183 = vmatpush1.bf16.msra.mxu0 0
    %184 = vmatprep.subr.bf16.mxu0 0
    %185 = vmatpush1.bf16.msra.mxu0 0
    %186 = vmatprep.subr.bf16.mxu0 0
    %187 = vmatpush1.bf16.msra.mxu0 0
    %188 = vmatprep.subr.bf16.mxu0 0
    %189 = vmatpush1.bf16.msra.mxu0 0
    %190 = vmatprep.subr.bf16.mxu0 0
    %191 = vmatpush1.bf16.msra.mxu0 0
    %192 = vmatprep.subr.bf16.mxu0 0
    %193 = vmatpush1.bf16.msra.mxu0 0
    %194 = vmatprep.subr.bf16.mxu0 0
    %195 = vmatpush1.bf16.msra.mxu0 0
    %196 = vmatprep.mubr.bf16.mxu0 0
    %197 = vmatmul.mubr.bf16.gmra.mrb[0].mxu0 %v115
    %v198 = vpop.f32.mrb[0].mxu0
    %v199 = vadd.f32 0.0, %v198
    %v200 = vpop.f32.mrb[0].mxu0
    %v201 = vpop.f32.mrb[0].mxu0
    %v202 = vadd.f32 0.0, %v201
    %v203 = vpop.f32.mrb[0].mxu0
    %204 = vdwg.mxu0
    %v205 = vpack.c.bf16 %v202, %v199
    %v208 = vunpack.c.l.b16 %v109
    %v209 = vunpack.c.l.b16 %v110
    %v210 = vpack.c.b16 %v209, %v208
    %vm211 = vcmask 130048
    %v213 = vsel %vm211, %v210, 0
    %215 = vmatprep.subr.bf16.mxu0 0
    %216 = vmatpush1.bf16.msra.mxu0 %v205
    %217 = vmatprep.subr.bf16.mxu0 0
    %218 = vmatpush1.bf16.msra.mxu0 0
    %219 = vmatprep.subr.bf16.mxu0 0
    %220 = vmatpush1.bf16.msra.mxu0 0
    %221 = vmatprep.subr.bf16.mxu0 0
    %222 = vmatpush1.bf16.msra.mxu0 0
    %223 = vmatprep.subr.bf16.mxu0 0
    %224 = vmatpush1.bf16.msra.mxu0 0
    %225 = vmatprep.subr.bf16.mxu0 0
    %226 = vmatpush1.bf16.msra.mxu0 0
    %227 = vmatprep.subr.bf16.mxu0 0
    %228 = vmatpush1.bf16.msra.mxu0 0
    %229 = vmatprep.subr.bf16.mxu0 0
    %230 = vmatpush1.bf16.msra.mxu0 0
    %231 = vmatprep.subr.bf16.mxu0 0
    %232 = vmatpush1.bf16.msra.mxu0 0
    %233 = vmatprep.subr.bf16.mxu0 0
    %234 = vmatpush1.bf16.msra.mxu0 0
    %235 = vmatprep.subr.bf16.mxu0 0
    %236 = vmatpush1.bf16.msra.mxu0 0
    %237 = vmatprep.subr.bf16.mxu0 0
    %238 = vmatpush1.bf16.msra.mxu0 0
    %239 = vmatprep.subr.bf16.mxu0 0
    %240 = vmatpush1.bf16.msra.mxu0 0
    %241 = vmatprep.subr.bf16.mxu0 0
    %242 = vmatpush1.bf16.msra.mxu0 0
    %243 = vmatprep.subr.bf16.mxu0 0
    %244 = vmatpush1.bf16.msra.mxu0 0
    %245 = vmatprep.subr.bf16.mxu0 0
    %246 = vmatpush1.bf16.msra.mxu0 0
    %247 = vmatprep.mubr.bf16.mxu0 0
    %248 = vmatmul.mubr.bf16.gmra.mrb[0].mxu0 %v213
    %v249 = vpop.f32.mrb[0].mxu0
    %v250 = vadd.f32 0.0, %v249
    %v251 = vpop.f32.mrb[0].mxu0
    %v252 = vpop.f32.mrb[0].mxu0
    %v253 = vadd.f32 0.0, %v252
    %v254 = vpop.f32.mrb[0].mxu0
    %255 = vdwg.mxu0
    %v256 = vld [vmem:[%s7] sm:$0xf]
    %v257 = vld [vmem:[%s7 + $0x4] sm:$0xf]
    %v258 = vld [vmem:[%s8] sm:$0xf]
    %v259 = vld [vmem:[%s8 + $0x4] sm:$0xf]
    %v260 = vld [vmem:[%s9] sm:$0xf]
    %v261 = vld [vmem:[%s9 + $0x4] sm:$0xf]
    %v262 = vld [vmem:[%s9 + $0x8] sm:$0xf]
    %v263 = vld [vmem:[%s9 + $0xc] sm:$0xf]
    %v264 = vld [vmem:[%s9 + $0x10] sm:$0xf]
    %v265 = vld [vmem:[%s9 + $0x14] sm:$0xf]
    %v266 = vld [vmem:[%s9 + $0x18] sm:$0xf]
    %v267 = vld [vmem:[%s9 + $0x1c] sm:$0xf]
    %v268 = vld [vmem:[%s9 + $0x20] sm:$0xf]
    %v269 = vld [vmem:[%s9 + $0x24] sm:$0xf]
    %v270 = vld [vmem:[%s9 + $0x28] sm:$0xf]
    %v271 = vld [vmem:[%s9 + $0x2c] sm:$0xf]
    %v272 = vld [vmem:[%s9 + $0x30] sm:$0xf]
    %v273 = vld [vmem:[%s9 + $0x34] sm:$0xf]
    %v274 = vld [vmem:[%s9 + $0x38] sm:$0xf]
    %v275 = vld [vmem:[%s9 + $0x3c] sm:$0xf]
    %v276 = vld [vmem:[%s9 + $0x40] sm:$0xf]
    %v277 = vld [vmem:[%s9 + $0x44] sm:$0xf]
    %v278 = vld [vmem:[%s9 + $0x48] sm:$0xf]
    %v279 = vld [vmem:[%s9 + $0x4c] sm:$0xf]
    %v280 = vld [vmem:[%s9 + $0x50] sm:$0xf]
    %v281 = vld [vmem:[%s9 + $0x54] sm:$0xf]
    %v282 = vld [vmem:[%s9 + $0x58] sm:$0xf]
    %v283 = vld [vmem:[%s9 + $0x5c] sm:$0xf]
    %v284 = vld [vmem:[%s9 + $0x60] sm:$0xf]
    %v285 = vld [vmem:[%s9 + $0x64] sm:$0xf]
    %v286 = vld [vmem:[%s9 + $0x68] sm:$0xf]
    %v287 = vld [vmem:[%s9 + $0x6c] sm:$0xf]
    %v288 = vld [vmem:[%s9 + $0x70] sm:$0xf]
    %v289 = vld [vmem:[%s9 + $0x74] sm:$0xf]
    %v290 = vld [vmem:[%s9 + $0x78] sm:$0xf]
    %v291 = vld [vmem:[%s9 + $0x7c] sm:$0xf]
    %v292 = vld [vmem:[%s9 + $0x80] sm:$0xf]
    %v293 = vld [vmem:[%s9 + $0x84] sm:$0xf]
    %v294 = vld [vmem:[%s9 + $0x88] sm:$0xf]
    %v295 = vld [vmem:[%s9 + $0x8c] sm:$0xf]
    %v296 = vld [vmem:[%s9 + $0x90] sm:$0xf]
    %v297 = vld [vmem:[%s9 + $0x94] sm:$0xf]
    %v298 = vld [vmem:[%s9 + $0x98] sm:$0xf]
    %v299 = vld [vmem:[%s9 + $0x9c] sm:$0xf]
    %v300 = vld [vmem:[%s9 + $0xa0] sm:$0xf]
    %v301 = vld [vmem:[%s9 + $0xa4] sm:$0xf]
    %v302 = vld [vmem:[%s9 + $0xa8] sm:$0xf]
    %v303 = vld [vmem:[%s9 + $0xac] sm:$0xf]
    %v304 = vld [vmem:[%s9 + $0xb0] sm:$0xf]
    %v305 = vld [vmem:[%s9 + $0xb4] sm:$0xf]
    %v306 = vld [vmem:[%s9 + $0xb8] sm:$0xf]
    %v307 = vld [vmem:[%s9 + $0xbc] sm:$0xf]
    %v308 = vld [vmem:[%s10] sm:$0x1]
    %v309 = vpack.c.bf16 %v253, %v250
    %v312 = vunpack.c.l.b16 %v256
    %v313 = vunpack.c.l.b16 %v257
    %v314 = vpack.c.b16 %v313, %v312
    %v316 = vsel %vm211, %v314, 0
    %318 = vmatprep.subr.bf16.mxu0 0
    %319 = vmatpush1.bf16.msra.mxu0 %v309
    %320 = vmatprep.subr.bf16.mxu0 0
    %321 = vmatpush1.bf16.msra.mxu0 0
    %322 = vmatprep.subr.bf16.mxu0 0
    %323 = vmatpush1.bf16.msra.mxu0 0
    %324 = vmatprep.subr.bf16.mxu0 0
    %325 = vmatpush1.bf16.msra.mxu0 0
    %326 = vmatprep.subr.bf16.mxu0 0
    %327 = vmatpush1.bf16.msra.mxu0 0
    %328 = vmatprep.subr.bf16.mxu0 0
    %329 = vmatpush1.bf16.msra.mxu0 0
    %330 = vmatprep.subr.bf16.mxu0 0
    %331 = vmatpush1.bf16.msra.mxu0 0
    %332 = vmatprep.subr.bf16.mxu0 0
    %333 = vmatpush1.bf16.msra.mxu0 0
    %334 = vmatprep.subr.bf16.mxu0 0
    %335 = vmatpush1.bf16.msra.mxu0 0
    %336 = vmatprep.subr.bf16.mxu0 0
    %337 = vmatpush1.bf16.msra.mxu0 0
    %338 = vmatprep.subr.bf16.mxu0 0
    %339 = vmatpush1.bf16.msra.mxu0 0
    %340 = vmatprep.subr.bf16.mxu0 0
    %341 = vmatpush1.bf16.msra.mxu0 0
    %342 = vmatprep.subr.bf16.mxu0 0
    %343 = vmatpush1.bf16.msra.mxu0 0
    %344 = vmatprep.subr.bf16.mxu0 0
    %345 = vmatpush1.bf16.msra.mxu0 0
    %346 = vmatprep.subr.bf16.mxu0 0
    %347 = vmatpush1.bf16.msra.mxu0 0
    %348 = vmatprep.subr.bf16.mxu0 0
    %349 = vmatpush1.bf16.msra.mxu0 0
    %350 = vmatprep.mubr.bf16.mxu0 0
    %351 = vmatmul.mubr.bf16.gmra.mrb[0].mxu0 %v316
    %v352 = vpop.f32.mrb[0].mxu0
    %v353 = vadd.f32 0.0, %v352
    %v354 = vpop.f32.mrb[0].mxu0
    %v355 = vpop.f32.mrb[0].mxu0
    %v356 = vadd.f32 0.0, %v355
    %v357 = vpop.f32.mrb[0].mxu0
    %358 = vdwg.mxu0
    %v361 = vunpack.c.l.b16 %v258
    %v362 = vunpack.c.l.b16 %v259
    %v363 = vpack.c.b16 %v362, %v361
    %v365 = vsel %vm211, %v363, 0
    %367 = vmatprep.subr.bf16.mxu0 0
    %368 = vmatpush1.bf16.msra.mxu0 %v309
    %369 = vmatprep.subr.bf16.mxu0 0
    %370 = vmatpush1.bf16.msra.mxu0 0
    %371 = vmatprep.subr.bf16.mxu0 0
    %372 = vmatpush1.bf16.msra.mxu0 0
    %373 = vmatprep.subr.bf16.mxu0 0
    %374 = vmatpush1.bf16.msra.mxu0 0
    %375 = vmatprep.subr.bf16.mxu0 0
    %376 = vmatpush1.bf16.msra.mxu0 0
    %377 = vmatprep.subr.bf16.mxu0 0
    %378 = vmatpush1.bf16.msra.mxu0 0
    %379 = vmatprep.subr.bf16.mxu0 0
    %380 = vmatpush1.bf16.msra.mxu0 0
    %381 = vmatprep.subr.bf16.mxu0 0
    %382 = vmatpush1.bf16.msra.mxu0 0
    %383 = vmatprep.subr.bf16.mxu0 0
    %384 = vmatpush1.bf16.msra.mxu0 0
    %385 = vmatprep.subr.bf16.mxu0 0
    %386 = vmatpush1.bf16.msra.mxu0 0
    %387 = vmatprep.subr.bf16.mxu0 0
    %388 = vmatpush1.bf16.msra.mxu0 0
    %389 = vmatprep.subr.bf16.mxu0 0
    %390 = vmatpush1.bf16.msra.mxu0 0
    %391 = vmatprep.subr.bf16.mxu0 0
    %392 = vmatpush1.bf16.msra.mxu0 0
    %393 = vmatprep.subr.bf16.mxu0 0
    %394 = vmatpush1.bf16.msra.mxu0 0
    %395 = vmatprep.subr.bf16.mxu0 0
    %396 = vmatpush1.bf16.msra.mxu0 0
    %397 = vmatprep.subr.bf16.mxu0 0
    %398 = vmatpush1.bf16.msra.mxu0 0
    %399 = vmatprep.mubr.bf16.mxu0 0
    %400 = vmatmul.mubr.bf16.gmra.mrb[0].mxu0 %v365
    %v401 = vpop.f32.mrb[0].mxu0
    %v402 = vadd.f32 0.0, %v401
    %v403 = vpop.f32.mrb[0].mxu0
    %v404 = vpop.f32.mrb[0].mxu0
    %v405 = vadd.f32 0.0, %v404
    %v406 = vpop.f32.mrb[0].mxu0
    %407 = vdwg.mxu0
    %v408 = vpack.c.bf16 %v356, %v353
    %v409 = vpack.c.bf16 %v405, %v402
    %v411 = vlaneseq
    %v412 = vshrl.u32 %v411, 7
    %v413 = vsub.s32 0, %v412
    %v414 = vrot.slane %v308, %v413
    %v464 = vunpack.c.l.b16 %v260
    %v465 = vunpack.c.l.b16 %v261
    %v466 = vunpack.c.l.b16 %v262
    %v467 = vunpack.c.l.b16 %v263
    %v468 = vunpack.c.l.b16 %v264
    %v469 = vunpack.c.l.b16 %v265
    %v470 = vunpack.c.l.b16 %v266
    %v471 = vunpack.c.l.b16 %v267
    %v472 = vunpack.c.l.b16 %v268
    %v473 = vunpack.c.l.b16 %v269
    %v474 = vunpack.c.l.b16 %v270
    %v475 = vunpack.c.l.b16 %v271
    %v476 = vunpack.c.l.b16 %v272
    %v477 = vunpack.c.l.b16 %v273
    %v478 = vunpack.c.l.b16 %v274
    %v479 = vunpack.c.l.b16 %v275
    %v480 = vunpack.c.l.b16 %v276
    %v481 = vunpack.c.l.b16 %v277
    %v482 = vunpack.c.l.b16 %v278
    %v483 = vunpack.c.l.b16 %v279
    %v484 = vunpack.c.l.b16 %v280
    %v485 = vunpack.c.l.b16 %v281
    %v486 = vunpack.c.l.b16 %v282
    %v487 = vunpack.c.l.b16 %v283
    %v488 = vunpack.c.l.b16 %v284
    %v489 = vunpack.c.l.b16 %v285
    %v490 = vunpack.c.l.b16 %v286
    %v491 = vunpack.c.l.b16 %v287
    %v492 = vunpack.c.l.b16 %v288
    %v493 = vunpack.c.l.b16 %v289
    %v494 = vunpack.c.l.b16 %v290
    %v495 = vunpack.c.l.b16 %v291
    %v496 = vunpack.c.l.b16 %v292
    %v497 = vunpack.c.l.b16 %v293
    %v498 = vunpack.c.l.b16 %v294
    %v499 = vunpack.c.l.b16 %v295
    %v500 = vunpack.c.l.b16 %v296
    %v501 = vunpack.c.l.b16 %v297
    %v502 = vunpack.c.l.b16 %v298
    %v503 = vunpack.c.l.b16 %v299
    %v504 = vunpack.c.l.b16 %v300
    %v505 = vunpack.c.l.b16 %v301
    %v506 = vunpack.c.l.b16 %v302
    %v507 = vunpack.c.l.b16 %v303
    %v508 = vunpack.c.l.b16 %v304
    %v509 = vunpack.c.l.b16 %v305
    %v510 = vunpack.c.l.b16 %v306
    %v511 = vunpack.c.l.b16 %v307
    %v512 = vpack.c.b16 %v465, %v464
    %v513 = vpack.c.b16 %v467, %v466
    %v514 = vpack.c.b16 %v469, %v468
    %v515 = vpack.c.b16 %v471, %v470
    %v516 = vpack.c.b16 %v473, %v472
    %v517 = vpack.c.b16 %v475, %v474
    %v518 = vpack.c.b16 %v477, %v476
    %v519 = vpack.c.b16 %v479, %v478
    %v520 = vpack.c.b16 %v481, %v480
    %v521 = vpack.c.b16 %v483, %v482
    %v522 = vpack.c.b16 %v485, %v484
    %v523 = vpack.c.b16 %v487, %v486
    %v524 = vpack.c.b16 %v489, %v488
    %v525 = vpack.c.b16 %v491, %v490
    %v526 = vpack.c.b16 %v493, %v492
    %v527 = vpack.c.b16 %v495, %v494
    %v528 = vpack.c.b16 %v497, %v496
    %v529 = vpack.c.b16 %v499, %v498
    %v530 = vpack.c.b16 %v501, %v500
    %v531 = vpack.c.b16 %v503, %v502
    %v532 = vpack.c.b16 %v505, %v504
    %v533 = vpack.c.b16 %v507, %v506
    %v534 = vpack.c.b16 %v509, %v508
    %v535 = vpack.c.b16 %v511, %v510
    %560 = vmatprep.subr.bf16.mxu0 0
    %561 = vmatpush1.bf16.msra.mxu0 %v512
    %562 = vmatprep.subr.bf16.mxu0 0
    %563 = vmatpush1.bf16.msra.mxu0 %v513
    %564 = vmatprep.subr.bf16.mxu0 0
    %565 = vmatpush1.bf16.msra.mxu0 %v514
    %566 = vmatprep.subr.bf16.mxu0 0
    %567 = vmatpush1.bf16.msra.mxu0 %v515
    %568 = vmatprep.subr.bf16.mxu0 0
    %569 = vmatpush1.bf16.msra.mxu0 %v516
    %570 = vmatprep.subr.bf16.mxu0 0
    %571 = vmatpush1.bf16.msra.mxu0 %v517
    %572 = vmatprep.subr.bf16.mxu0 0
    %573 = vmatpush1.bf16.msra.mxu0 %v518
    %574 = vmatprep.subr.bf16.mxu0 0
    %575 = vmatpush1.bf16.msra.mxu0 %v519
    %576 = vmatprep.subr.bf16.mxu0 0
    %577 = vmatpush1.bf16.msra.mxu0 %v520
    %578 = vmatprep.subr.bf16.mxu0 0
    %579 = vmatpush1.bf16.msra.mxu0 %v521
    %580 = vmatprep.subr.bf16.mxu0 0
    %581 = vmatpush1.bf16.msra.mxu0 %v522
    %582 = vmatprep.subr.bf16.mxu0 0
    %583 = vmatpush1.bf16.msra.mxu0 %v523
    %584 = vmatprep.subr.bf16.mxu0 0
    %585 = vmatpush1.bf16.msra.mxu0 %v524
    %586 = vmatprep.subr.bf16.mxu0 0
    %587 = vmatpush1.bf16.msra.mxu0 %v525
    %588 = vmatprep.subr.bf16.mxu0 0
    %589 = vmatpush1.bf16.msra.mxu0 %v526
    %590 = vmatprep.subr.bf16.mxu0 0
    %591 = vmatpush1.bf16.msra.mxu0 %v527
    %592 = vmatprep.mubr.bf16.mxu0 %v309
    %593 = vmatmul.mubr.bf16.gmra.mrb[0].mxu0 %v408
    %v594 = vpop.f32.mrb[0].mxu0
    %v595 = vadd.f32 %v414, %v594
    %v596 = vpop.f32.mrb[0].mxu0
    %v597 = vpop.f32.mrb[0].mxu0
    %v598 = vadd.f32 %v414, %v597
    %v599 = vpop.f32.mrb[0].mxu0
    %600 = vdwg.mxu0
    %601 = vmatprep.subr.bf16.mxu0 0
    %602 = vmatpush1.bf16.msra.mxu0 %v528
    %603 = vmatprep.subr.bf16.mxu0 0
    %604 = vmatpush1.bf16.msra.mxu0 %v529
    %605 = vmatprep.subr.bf16.mxu0 0
    %606 = vmatpush1.bf16.msra.mxu0 %v530
    %607 = vmatprep.subr.bf16.mxu0 0
    %608 = vmatpush1.bf16.msra.mxu0 %v531
    %609 = vmatprep.subr.bf16.mxu0 0
    %610 = vmatpush1.bf16.msra.mxu0 %v532
    %611 = vmatprep.subr.bf16.mxu0 0
    %612 = vmatpush1.bf16.msra.mxu0 %v533
    %613 = vmatprep.subr.bf16.mxu0 0
    %614 = vmatpush1.bf16.msra.mxu0 %v534
    %615 = vmatprep.subr.bf16.mxu0 0
    %616 = vmatpush1.bf16.msra.mxu0 %v535
    %617 = vmatprep.subr.bf16.mxu0 0
    %618 = vmatpush1.bf16.msra.mxu0 0
    %619 = vmatprep.subr.bf16.mxu0 0
    %620 = vmatpush1.bf16.msra.mxu0 0
    %621 = vmatprep.subr.bf16.mxu0 0
    %622 = vmatpush1.bf16.msra.mxu0 0
    %623 = vmatprep.subr.bf16.mxu0 0
    %624 = vmatpush1.bf16.msra.mxu0 0
    %625 = vmatprep.subr.bf16.mxu0 0
    %626 = vmatpush1.bf16.msra.mxu0 0
    %627 = vmatprep.subr.bf16.mxu0 0
    %628 = vmatpush1.bf16.msra.mxu0 0
    %629 = vmatprep.subr.bf16.mxu0 0
    %630 = vmatpush1.bf16.msra.mxu0 0
    %631 = vmatprep.subr.bf16.mxu0 0
    %632 = vmatpush1.bf16.msra.mxu0 0
    %633 = vmatprep.mubr.bf16.mxu0 0
    %634 = vmatmul.mubr.bf16.gmra.mrb[0].mxu0 %v409
    %v635 = vpop.f32.mrb[0].mxu0
    %v636 = vadd.f32 %v595, %v635
    %v637 = vpop.f32.mrb[0].mxu0
    %v638 = vpop.f32.mrb[0].mxu0
    %v639 = vadd.f32 %v598, %v638
    %v640 = vpop.f32.mrb[0].mxu0
    %641 = vdwg.mxu0
    %v642 = vmul.f32 %v636, %v636
    %v643 = vmul.f32 %v639, %v639
    %v644 = vld [vmem:[%s14] sm:$0x1]
    %v645 = vld [vmem:[%s13] sm:$0xf]
    %v646 = vld [vmem:[%s13 + $0x4] sm:$0xf]
    %v647 = vld [vmem:[%s13 + $0x8] sm:$0xf]
    %v648 = vld [vmem:[%s13 + $0xc] sm:$0xf]
    %v649 = vld [vmem:[%s13 + $0x10] sm:$0xf]
    %v650 = vld [vmem:[%s13 + $0x14] sm:$0xf]
    %v651 = vld [vmem:[%s13 + $0x18] sm:$0xf]
    %v652 = vld [vmem:[%s13 + $0x1c] sm:$0xf]
    %v653 = vld [vmem:[%s13 + $0x20] sm:$0xf]
    %v654 = vld [vmem:[%s13 + $0x24] sm:$0xf]
    %v655 = vld [vmem:[%s13 + $0x28] sm:$0xf]
    %v656 = vld [vmem:[%s13 + $0x2c] sm:$0xf]
    %v657 = vld [vmem:[%s13 + $0x30] sm:$0xf]
    %v658 = vld [vmem:[%s13 + $0x34] sm:$0xf]
    %v659 = vld [vmem:[%s13 + $0x38] sm:$0xf]
    %v660 = vld [vmem:[%s13 + $0x3c] sm:$0xf]
    %v661 = vpack.c.bf16 %v639, %v636
    %v662 = vpack.c.bf16 %v643, %v642
    %v679 = vunpack.c.l.b16 %v645
    %v680 = vunpack.c.l.b16 %v646
    %v681 = vunpack.c.l.b16 %v647
    %v682 = vunpack.c.l.b16 %v648
    %v683 = vunpack.c.l.b16 %v649
    %v684 = vunpack.c.l.b16 %v650
    %v685 = vunpack.c.l.b16 %v651
    %v686 = vunpack.c.l.b16 %v652
    %v687 = vunpack.c.l.b16 %v653
    %v688 = vunpack.c.l.b16 %v654
    %v689 = vunpack.c.l.b16 %v655
    %v690 = vunpack.c.l.b16 %v656
    %v691 = vunpack.c.l.b16 %v657
    %v692 = vunpack.c.l.b16 %v658
    %v693 = vunpack.c.l.b16 %v659
    %v694 = vunpack.c.l.b16 %v660
    %v695 = vpack.c.b16 %v680, %v679
    %v696 = vpack.c.b16 %v682, %v681
    %v697 = vpack.c.b16 %v684, %v683
    %v698 = vpack.c.b16 %v686, %v685
    %v699 = vpack.c.b16 %v688, %v687
    %v700 = vpack.c.b16 %v690, %v689
    %v701 = vpack.c.b16 %v692, %v691
    %v702 = vpack.c.b16 %v694, %v693
    %711 = vmatprep.subr.bf16.mxu0 0
    %712 = vmatpush1.bf16.msra.mxu0 %v695
    %713 = vmatprep.subr.bf16.mxu0 0
    %714 = vmatpush1.bf16.msra.mxu0 %v696
    %715 = vmatprep.subr.bf16.mxu0 0
    %716 = vmatpush1.bf16.msra.mxu0 %v697
    %717 = vmatprep.subr.bf16.mxu0 0
    %718 = vmatpush1.bf16.msra.mxu0 %v698
    %719 = vmatprep.subr.bf16.mxu0 0
    %720 = vmatpush1.bf16.msra.mxu0 %v699
    %721 = vmatprep.subr.bf16.mxu0 0
    %722 = vmatpush1.bf16.msra.mxu0 %v700
    %723 = vmatprep.subr.bf16.mxu0 0
    %724 = vmatpush1.bf16.msra.mxu0 %v701
    %725 = vmatprep.subr.bf16.mxu0 0
    %726 = vmatpush1.bf16.msra.mxu0 %v702
    %727 = vmatprep.subr.bf16.mxu0 0
    %728 = vmatpush1.bf16.msra.mxu0 0
    %729 = vmatprep.subr.bf16.mxu0 0
    %730 = vmatpush1.bf16.msra.mxu0 0
    %731 = vmatprep.subr.bf16.mxu0 0
    %732 = vmatpush1.bf16.msra.mxu0 0
    %733 = vmatprep.subr.bf16.mxu0 0
    %734 = vmatpush1.bf16.msra.mxu0 0
    %735 = vmatprep.subr.bf16.mxu0 0
    %736 = vmatpush1.bf16.msra.mxu0 0
    %737 = vmatprep.subr.bf16.mxu0 0
    %738 = vmatpush1.bf16.msra.mxu0 0
    %739 = vmatprep.subr.bf16.mxu0 0
    %740 = vmatpush1.bf16.msra.mxu0 0
    %741 = vmatprep.subr.bf16.mxu0 0
    %742 = vmatpush1.bf16.msra.mxu0 0
    %743 = vmatprep.mubr.bf16.mxu0 0
    %744 = vmatmul.mubr.bf16.gmra.mrb[0].mxu0 %v661
    %v745 = vpop.f32.mrb[0].mxu0
    %v746 = vadd.f32 0.0, %v745
    %v747 = vpop.f32.mrb[0].mxu0
    %v748 = vpop.f32.mrb[0].mxu0
    %v749 = vadd.f32 0.0, %v748
    %v750 = vpop.f32.mrb[0].mxu0
    %751 = vmatprep.mubr.bf16.mxu0 0
    %752 = vmatmul.mubr.bf16.gmra.mrb[0].mxu0 %v662
    %v753 = vpop.f32.mrb[0].mxu0
    %v754 = vadd.f32 0.0, %v753
    %v755 = vpop.f32.mrb[0].mxu0
    %v756 = vpop.f32.mrb[0].mxu0
    %v757 = vadd.f32 0.0, %v756
    %v758 = vpop.f32.mrb[0].mxu0
    %759 = vdwg.mxu0
    %v760 = vpack.c.bf16 %v749, %v746
    %v761 = vpack.c.bf16 %v757, %v754
    %vm762 = vcmask 261120
    %v764 = vsel %vm762, %v644, 0
    %766 = vmatprep.subr.bf16.mxu0 0
    %767 = vmatpush1.bf16.msra.mxu0 %v760
    %768 = vmatprep.subr.bf16.mxu0 0
    %769 = vmatpush1.bf16.msra.mxu0 %v761
    %770 = vmatprep.subr.bf16.mxu0 0
    %771 = vmatpush1.bf16.msra.mxu0 0
    %772 = vmatprep.subr.bf16.mxu0 0
    %773 = vmatpush1.bf16.msra.mxu0 0
    %774 = vmatprep.subr.bf16.mxu0 0
    %775 = vmatpush1.bf16.msra.mxu0 0
    %776 = vmatprep.subr.bf16.mxu0 0
    %777 = vmatpush1.bf16.msra.mxu0 0
    %778 = vmatprep.subr.bf16.mxu0 0
    %779 = vmatpush1.bf16.msra.mxu0 0
    %780 = vmatprep.subr.bf16.mxu0 0
    %781 = vmatpush1.bf16.msra.mxu0 0
    %782 = vmatprep.subr.bf16.mxu0 0
    %783 = vmatpush1.bf16.msra.mxu0 0
    %784 = vmatprep.subr.bf16.mxu0 0
    %785 = vmatpush1.bf16.msra.mxu0 0
    %786 = vmatprep.subr.bf16.mxu0 0
    %787 = vmatpush1.bf16.msra.mxu0 0
    %788 = vmatprep.subr.bf16.mxu0 0
    %789 = vmatpush1.bf16.msra.mxu0 0
    %790 = vmatprep.subr.bf16.mxu0 0
    %791 = vmatpush1.bf16.msra.mxu0 0
    %792 = vmatprep.subr.bf16.mxu0 0
    %793 = vmatpush1.bf16.msra.mxu0 0
    %794 = vmatprep.subr.bf16.mxu0 0
    %795 = vmatpush1.bf16.msra.mxu0 0
    %796 = vmatprep.subr.bf16.mxu0 0
    %797 = vmatpush1.bf16.msra.mxu0 0
    %798 = vmatprep.mubr.bf16.mxu0 0
    %799 = vmatmul.mubr.bf16.gmra.mrb[0].mxu0 %v764
    %v800 = vpop.f32.mrb[0].mxu0
    %v801 = vadd.f32 0.0, %v800
    %v802 = vpop.f32.mrb[0].mxu0
    %v803 = vpop.f32.mrb[0].mxu0
    %v804 = vpop.f32.mrb[0].mxu0
    %805 = vdwg.mxu0
    %v806 = vrcp.pop 256.0
    %v807 = vmul.f32 %v801, %v806
    %v808 = vmul.f32 %v807, %v807
    %v810 = vrot.slane %v808, 7
    %v812 = vsub.f32 %v807, %v810
    %v813 = vmax.f32 %v812, 0.0
    %v814 = vld [vmem:[%s11] sm:$0x1]
    %v815 = vadd.f32 %v813, 1e-05
    %v816 = vrsqrt.pop %v815
    %v819 = vunpack.c.l.s4 1966171168
    %v820 = vunpack.c.0.s8 %v819
    %v821 = vlaneseq
    %v822 = vshrl.u32 %v821, 7
    %v823 = vsub.s32 %v820, %v822
    %v824 = vrot.slane %v816, %v823
    %v825 = vcombine.high %v824, %v824
    %v827 = vunpack.c.l.s4 1966171168
    %v828 = vunpack.c.0.s8 %v827
    %v829 = vlaneseq
    %v830 = vshrl.u32 %v829, 7
    %v831 = vsub.s32 %v828, %v830
    %v832 = vrot.slane %v825, %v831
    %v834 = vmul.f32 %v814, %v832
    %v835 = vld [vmem:[%s12] sm:$0x1]
    %v836 = vmul.f32 %v807, %v834
    %v837 = vsub.f32 %v835, %v836
    %v838 = vlaneseq
    %v839 = vshrl.u32 %v838, 7
    %vm840 = vcmp.eq.s32.totalorder %v839, 0
    %v842 = vlaneseq
    %v843 = vshrl.u32 %v842, 7
    %v844 = vsub.s32 0, %v843
    %v845 = vrot.slane %v834, %v844
    %v848 = vlaneseq
    %v849 = vshrl.u32 %v848, 7
    %v850 = vsub.s32 0, %v849
    %v851 = vrot.slane %v837, %v850
    %v853 = vsel %vm840, %v845, %v851
    %v854 = vld [vmem:[%s15] sm:$0xf]
    %v855 = vpack.c.bf16 %v853, %v853
    %vm856 = vcmask 64512
    %v858 = vsel %vm856, %v855, 0
    %vm860 = vcmask 1043456
    %v862 = vsel %vm860, %v854, 0
    %864 = vmatprep.subr.bf16.mxu0 0
    %865 = vmatpush1.bf16.msra.mxu0 %v862
    %866 = vmatprep.subr.bf16.mxu0 0
    %867 = vmatpush1.bf16.msra.mxu0 0
    %868 = vmatprep.subr.bf16.mxu0 0
    %869 = vmatpush1.bf16.msra.mxu0 0
    %870 = vmatprep.subr.bf16.mxu0 0
    %871 = vmatpush1.bf16.msra.mxu0 0
    %872 = vmatprep.subr.bf16.mxu0 0
    %873 = vmatpush1.bf16.msra.mxu0 0
    %874 = vmatprep.subr.bf16.mxu0 0
    %875 = vmatpush1.bf16.msra.mxu0 0
    %876 = vmatprep.subr.bf16.mxu0 0
    %877 = vmatpush1.bf16.msra.mxu0 0
    %878 = vmatprep.subr.bf16.mxu0 0
    %879 = vmatpush1.bf16.msra.mxu0 0
    %880 = vmatprep.subr.bf16.mxu0 0
    %881 = vmatpush1.bf16.msra.mxu0 0
    %882 = vmatprep.subr.bf16.mxu0 0
    %883 = vmatpush1.bf16.msra.mxu0 0
    %884 = vmatprep.subr.bf16.mxu0 0
    %885 = vmatpush1.bf16.msra.mxu0 0
    %886 = vmatprep.subr.bf16.mxu0 0
    %887 = vmatpush1.bf16.msra.mxu0 0
    %888 = vmatprep.subr.bf16.mxu0 0
    %889 = vmatpush1.bf16.msra.mxu0 0
    %890 = vmatprep.subr.bf16.mxu0 0
    %891 = vmatpush1.bf16.msra.mxu0 0
    %892 = vmatprep.subr.bf16.mxu0 0
    %893 = vmatpush1.bf16.msra.mxu0 0
    %894 = vmatprep.subr.bf16.mxu0 0
    %895 = vmatpush1.bf16.msra.mxu0 0
    %896 = vmatprep.mubr.bf16.mxu0 0
    %897 = vmatmul.mubr.bf16.gmra.mrb[0].mxu0 %v858
    %v898 = vpop.f32.mrb[0].mxu0
    %v899 = vadd.f32 0.0, %v898
    %v900 = vpop.f32.mrb[0].mxu0
    %v901 = vpop.f32.mrb[0].mxu0
    %v902 = vpop.f32.mrb[0].mxu0
    %903 = vdwg.mxu0
    %v904 = vlaneseq
    %v905 = vshrl.u32 %v904, 7
    %v906 = vsub.s32 0, %v905
    %v907 = vrot.slane %v899, %v906
    %v908 = vmul.f32 %v636, %v907
    %v909 = vmul.f32 %v639, %v907
    %v910 = vlaneseq
    %v911 = vshrl.u32 %v910, 7
    %v912 = vsub.s32 1, %v911
    %v913 = vrot.slane %v899, %v912
    %v914 = vadd.f32 %v908, %v913
    %v915 = vadd.f32 %v909, %v913
    %v916 = vmax.f32 %v914, 0.0
    %v917 = vmax.f32 %v915, 0.0
    %v918 = vld [vmem:[%s2] sm:$0xff]
    %v919 = vld [vmem:[%s2 + $0x8] sm:$0xff]
    %v920 = vld [vmem:[%s2 + $0x10] sm:$0xff]
    %v921 = vld [vmem:[%s2 + $0x18] sm:$0xff]
    %v922 = vld [vmem:[%s4] sm:$0xff]
    %v923 = vld [vmem:[%s4 + $0x8] sm:$0xff]
    %v924 = vld [vmem:[%s4 + $0x10] sm:$0xff]
    %v925 = vld [vmem:[%s4 + $0x18] sm:$0xff]
    %v926 = vld [vmem:[%s16] sm:$0xf]
    %v927 = vld [vmem:[%s16 + $0x4] sm:$0xf]
    %v928 = vld [vmem:[%s16 + $0x8] sm:$0xf]
    %v929 = vld [vmem:[%s16 + $0xc] sm:$0xf]
    %v930 = vld [vmem:[%s16 + $0x10] sm:$0xf]
    %v931 = vld [vmem:[%s16 + $0x14] sm:$0xf]
    %v932 = vld [vmem:[%s16 + $0x18] sm:$0xf]
    %v933 = vld [vmem:[%s16 + $0x1c] sm:$0xf]
    %v934 = vld [vmem:[%s16 + $0x20] sm:$0xf]
    %v935 = vld [vmem:[%s16 + $0x24] sm:$0xf]
    %v936 = vld [vmem:[%s16 + $0x28] sm:$0xf]
    %v937 = vld [vmem:[%s16 + $0x2c] sm:$0xf]
    %v938 = vld [vmem:[%s16 + $0x30] sm:$0xf]
    %v939 = vld [vmem:[%s16 + $0x34] sm:$0xf]
    %v940 = vld [vmem:[%s16 + $0x38] sm:$0xf]
    %v941 = vld [vmem:[%s16 + $0x3c] sm:$0xf]
    %v942 = vld [vmem:[%s17] sm:$0xf]
    %v943 = vld [vmem:[%s17 + $0x4] sm:$0xf]
    %v944 = vld [vmem:[%s17 + $0x8] sm:$0xf]
    %v945 = vld [vmem:[%s17 + $0xc] sm:$0xf]
    %vm946 = vcmp.eq.s32.totalorder %v918, %v922
    %vm947 = vcmp.eq.s32.totalorder %v919, %v923
    %vm948 = vcmp.eq.s32.totalorder %v920, %v924
    %vm949 = vcmp.eq.s32.totalorder %v921, %v925
    %v950 = vsel %vm946, %v916, 0.0
    %v951 = vsel %vm947, %v917, 0.0
    %v952 = vsel %vm948, %v916, 0.0
    %v953 = vsel %vm949, %v917, 0.0
    %v954 = vpack.c.bf16 %v951, %v950
    %v955 = vpack.c.bf16 %v953, %v952
    %v972 = vunpack.c.l.b16 %v926
    %v973 = vunpack.c.l.b16 %v927
    %v974 = vunpack.c.l.b16 %v928
    %v975 = vunpack.c.l.b16 %v929
    %v976 = vunpack.c.l.b16 %v930
    %v977 = vunpack.c.l.b16 %v931
    %v978 = vunpack.c.l.b16 %v932
    %v979 = vunpack.c.l.b16 %v933
    %v980 = vunpack.c.l.b16 %v934
    %v981 = vunpack.c.l.b16 %v935
    %v982 = vunpack.c.l.b16 %v936
    %v983 = vunpack.c.l.b16 %v937
    %v984 = vunpack.c.l.b16 %v938
    %v985 = vunpack.c.l.b16 %v939
    %v986 = vunpack.c.l.b16 %v940
    %v987 = vunpack.c.l.b16 %v941
    %v988 = vpack.c.b16 %v973, %v972
    %v989 = vpack.c.b16 %v975, %v974
    %v990 = vpack.c.b16 %v977, %v976
    %v991 = vpack.c.b16 %v979, %v978
    %v992 = vpack.c.b16 %v981, %v980
    %v993 = vpack.c.b16 %v983, %v982
    %v994 = vpack.c.b16 %v985, %v984
    %v995 = vpack.c.b16 %v987, %v986
    %1004 = vmatprep.subr.bf16.mxu0 0
    %1005 = vmatpush1.bf16.msra.mxu0 %v988
    %1006 = vmatprep.subr.bf16.mxu0 0
    %1007 = vmatpush1.bf16.msra.mxu0 %v989
    %1008 = vmatprep.subr.bf16.mxu0 0
    %1009 = vmatpush1.bf16.msra.mxu0 %v990
    %1010 = vmatprep.subr.bf16.mxu0 0
    %1011 = vmatpush1.bf16.msra.mxu0 %v991
    %1012 = vmatprep.subr.bf16.mxu0 0
    %1013 = vmatpush1.bf16.msra.mxu0 %v992
    %1014 = vmatprep.subr.bf16.mxu0 0
    %1015 = vmatpush1.bf16.msra.mxu0 %v993
    %1016 = vmatprep.subr.bf16.mxu0 0
    %1017 = vmatpush1.bf16.msra.mxu0 %v994
    %1018 = vmatprep.subr.bf16.mxu0 0
    %1019 = vmatpush1.bf16.msra.mxu0 %v995
    %1020 = vmatprep.subr.bf16.mxu0 0
    %1021 = vmatpush1.bf16.msra.mxu0 0
    %1022 = vmatprep.subr.bf16.mxu0 0
    %1023 = vmatpush1.bf16.msra.mxu0 0
    %1024 = vmatprep.subr.bf16.mxu0 0
    %1025 = vmatpush1.bf16.msra.mxu0 0
    %1026 = vmatprep.subr.bf16.mxu0 0
    %1027 = vmatpush1.bf16.msra.mxu0 0
    %1028 = vmatprep.subr.bf16.mxu0 0
    %1029 = vmatpush1.bf16.msra.mxu0 0
    %1030 = vmatprep.subr.bf16.mxu0 0
    %1031 = vmatpush1.bf16.msra.mxu0 0
    %1032 = vmatprep.subr.bf16.mxu0 0
    %1033 = vmatpush1.bf16.msra.mxu0 0
    %1034 = vmatprep.subr.bf16.mxu0 0
    %1035 = vmatpush1.bf16.msra.mxu0 0
    %1036 = vmatprep.mubr.bf16.mxu0 0
    %1037 = vmatmul.mubr.bf16.gmra.mrb[0].mxu0 %v954
    %v1038 = vpop.f32.mrb[0].mxu0
    %v1039 = vadd.f32 0.0, %v1038
    %v1040 = vpop.f32.mrb[0].mxu0
    %v1041 = vpop.f32.mrb[0].mxu0
    %v1042 = vadd.f32 0.0, %v1041
    %v1043 = vpop.f32.mrb[0].mxu0
    %1044 = vmatprep.mubr.bf16.mxu0 0
    %1045 = vmatmul.mubr.bf16.gmra.mrb[0].mxu0 %v955
    %v1046 = vpop.f32.mrb[0].mxu0
    %v1047 = vadd.f32 0.0, %v1046
    %v1048 = vpop.f32.mrb[0].mxu0
    %v1049 = vpop.f32.mrb[0].mxu0
    %v1050 = vadd.f32 0.0, %v1049
    %v1051 = vpop.f32.mrb[0].mxu0
    %1052 = vdwg.mxu0
    %v1053 = vpack.c.bf16 %v1042, %v1039
    %v1054 = vpack.c.bf16 %v1050, %v1047
    %v1059 = vunpack.c.l.b16 %v942
    %v1060 = vunpack.c.l.b16 %v943
    %v1061 = vunpack.c.l.b16 %v944
    %v1062 = vunpack.c.l.b16 %v945
    %v1063 = vpack.c.b16 %v1060, %v1059
    %v1064 = vpack.c.b16 %v1062, %v1061
    %v1066 = vsel %vm762, %v1063, 0
    %v1069 = vsel %vm762, %v1064, 0
    %1071 = vmatprep.subr.bf16.mxu0 0
    %1072 = vmatpush1.bf16.msra.mxu0 %v1053
    %1073 = vmatprep.subr.bf16.mxu0 0
    %1074 = vmatpush1.bf16.msra.mxu0 %v1054
    %1075 = vmatprep.subr.bf16.mxu0 0
    %1076 = vmatpush1.bf16.msra.mxu0 0
    %1077 = vmatprep.subr.bf16.mxu0 0
    %1078 = vmatpush1.bf16.msra.mxu0 0
    %1079 = vmatprep.subr.bf16.mxu0 0
    %1080 = vmatpush1.bf16.msra.mxu0 0
    %1081 = vmatprep.subr.bf16.mxu0 0
    %1082 = vmatpush1.bf16.msra.mxu0 0
    %1083 = vmatprep.subr.bf16.mxu0 0
    %1084 = vmatpush1.bf16.msra.mxu0 0
    %1085 = vmatprep.subr.bf16.mxu0 0
    %1086 = vmatpush1.bf16.msra.mxu0 0
    %1087 = vmatprep.subr.bf16.mxu0 0
    %1088 = vmatpush1.bf16.msra.mxu0 0
    %1089 = vmatprep.subr.bf16.mxu0 0
    %1090 = vmatpush1.bf16.msra.mxu0 0
    %1091 = vmatprep.subr.bf16.mxu0 0
    %1092 = vmatpush1.bf16.msra.mxu0 0
    %1093 = vmatprep.subr.bf16.mxu0 0
    %1094 = vmatpush1.bf16.msra.mxu0 0
    %1095 = vmatprep.subr.bf16.mxu0 0
    %1096 = vmatpush1.bf16.msra.mxu0 0
    %1097 = vmatprep.subr.bf16.mxu0 0
    %1098 = vmatpush1.bf16.msra.mxu0 0
    %1099 = vmatprep.subr.bf16.mxu0 0
    %1100 = vmatpush1.bf16.msra.mxu0 0
    %1101 = vmatprep.subr.bf16.mxu0 0
    %1102 = vmatpush1.bf16.msra.mxu0 0
    %1103 = vmatprep.mubr.bf16.mxu0 0
    %1104 = vmatmul.mubr.bf16.gmra.mrb[0].mxu0 %v1066
    %v1105 = vpop.f32.mrb[0].mxu0
    %v1106 = vadd.f32 0.0, %v1105
    %v1107 = vpop.f32.mrb[0].mxu0
    %v1108 = vpop.f32.mrb[0].mxu0
    %v1109 = vadd.f32 0.0, %v1108
    %v1110 = vpop.f32.mrb[0].mxu0
    %1111 = vmatprep.mubr.bf16.mxu0 0
    %1112 = vmatmul.mubr.bf16.gmra.mrb[0].mxu0 %v1069
    %v1113 = vpop.f32.mrb[0].mxu0
    %v1114 = vadd.f32 0.0, %v1113
    %v1115 = vpop.f32.mrb[0].mxu0
    %v1116 = vpop.f32.mrb[0].mxu0
    %v1117 = vadd.f32 0.0, %v1116
    %v1118 = vpop.f32.mrb[0].mxu0
    %1119 = vdwg.mxu0
    %v1120 = vld [vmem:[%s18] sm:$0xf]
    %v1121 = vld [vmem:[%s18 + $0x4] sm:$0xf]
    %v1122 = vld [vmem:[%s18 + $0x8] sm:$0xf]
    %v1123 = vld [vmem:[%s18 + $0xc] sm:$0xf]
    %v1124 = vld [vmem:[%s19] sm:$0xf]
    %v1125 = vld [vmem:[%s19 + $0x4] sm:$0xf]
    %v1126 = vld [vmem:[%s19 + $0x8] sm:$0xf]
    %v1127 = vld [vmem:[%s19 + $0xc] sm:$0xf]
    %v1128 = vld [vmem:[%s20] sm:$0xf]
    %v1129 = vld [vmem:[%s20 + $0x4] sm:$0xf]
    %v1130 = vld [vmem:[%s20 + $0x8] sm:$0xf]
    %v1131 = vld [vmem:[%s20 + $0xc] sm:$0xf]
    %v1132 = vld [vmem:[%s20 + $0x10] sm:$0xf]
    %v1133 = vld [vmem:[%s20 + $0x14] sm:$0xf]
    %v1134 = vld [vmem:[%s20 + $0x18] sm:$0xf]
    %v1135 = vld [vmem:[%s20 + $0x1c] sm:$0xf]
    %v1136 = vld [vmem:[%s20 + $0x20] sm:$0xf]
    %v1137 = vld [vmem:[%s20 + $0x24] sm:$0xf]
    %v1138 = vld [vmem:[%s20 + $0x28] sm:$0xf]
    %v1139 = vld [vmem:[%s20 + $0x2c] sm:$0xf]
    %v1140 = vld [vmem:[%s20 + $0x30] sm:$0xf]
    %v1141 = vld [vmem:[%s20 + $0x34] sm:$0xf]
    %v1142 = vld [vmem:[%s20 + $0x38] sm:$0xf]
    %v1143 = vld [vmem:[%s20 + $0x3c] sm:$0xf]
    %v1144 = vld [vmem:[%s20 + $0x40] sm:$0xf]
    %v1145 = vld [vmem:[%s20 + $0x44] sm:$0xf]
    %v1146 = vld [vmem:[%s20 + $0x48] sm:$0xf]
    %v1147 = vld [vmem:[%s20 + $0x4c] sm:$0xf]
    %v1148 = vld [vmem:[%s20 + $0x50] sm:$0xf]
    %v1149 = vld [vmem:[%s20 + $0x54] sm:$0xf]
    %v1150 = vld [vmem:[%s20 + $0x58] sm:$0xf]
    %v1151 = vld [vmem:[%s20 + $0x5c] sm:$0xf]
    %v1152 = vld [vmem:[%s20 + $0x60] sm:$0xf]
    %v1153 = vld [vmem:[%s20 + $0x64] sm:$0xf]
    %v1154 = vld [vmem:[%s20 + $0x68] sm:$0xf]
    %v1155 = vld [vmem:[%s20 + $0x6c] sm:$0xf]
    %v1156 = vld [vmem:[%s20 + $0x70] sm:$0xf]
    %v1157 = vld [vmem:[%s20 + $0x74] sm:$0xf]
    %v1158 = vld [vmem:[%s20 + $0x78] sm:$0xf]
    %v1159 = vld [vmem:[%s20 + $0x7c] sm:$0xf]
    %v1160 = vld [vmem:[%s20 + $0x80] sm:$0xf]
    %v1161 = vld [vmem:[%s20 + $0x84] sm:$0xf]
    %v1162 = vld [vmem:[%s20 + $0x88] sm:$0xf]
    %v1163 = vld [vmem:[%s20 + $0x8c] sm:$0xf]
    %v1164 = vld [vmem:[%s20 + $0x90] sm:$0xf]
    %v1165 = vld [vmem:[%s20 + $0x94] sm:$0xf]
    %v1166 = vld [vmem:[%s20 + $0x98] sm:$0xf]
    %v1167 = vld [vmem:[%s20 + $0x9c] sm:$0xf]
    %v1168 = vld [vmem:[%s20 + $0xa0] sm:$0xf]
    %v1169 = vld [vmem:[%s20 + $0xa4] sm:$0xf]
    %v1170 = vld [vmem:[%s20 + $0xa8] sm:$0xf]
    %v1171 = vld [vmem:[%s20 + $0xac] sm:$0xf]
    %v1172 = vld [vmem:[%s20 + $0xb0] sm:$0xf]
    %v1173 = vld [vmem:[%s20 + $0xb4] sm:$0xf]
    %v1174 = vld [vmem:[%s20 + $0xb8] sm:$0xf]
    %v1175 = vld [vmem:[%s20 + $0xbc] sm:$0xf]
    %v1176 = vld [vmem:[%s21] sm:$0x1]
    %v1177 = vpack.c.bf16 %v1109, %v1106
    %v1178 = vpack.c.bf16 %v1117, %v1114
    %v1183 = vunpack.c.l.b16 %v1120
    %v1184 = vunpack.c.l.b16 %v1121
    %v1185 = vunpack.c.l.b16 %v1122
    %v1186 = vunpack.c.l.b16 %v1123
    %v1187 = vpack.c.b16 %v1184, %v1183
    %v1188 = vpack.c.b16 %v1186, %v1185
    %v1190 = vsel %vm762, %v1187, 0
    %v1193 = vsel %vm762, %v1188, 0
    %1195 = vmatprep.subr.bf16.mxu0 0
    %1196 = vmatpush1.bf16.msra.mxu0 %v1177
    %1197 = vmatprep.subr.bf16.mxu0 0
    %1198 = vmatpush1.bf16.msra.mxu0 %v1178
    %1199 = vmatprep.subr.bf16.mxu0 0
    %1200 = vmatpush1.bf16.msra.mxu0 0
    %1201 = vmatprep.subr.bf16.mxu0 0
    %1202 = vmatpush1.bf16.msra.mxu0 0
    %1203 = vmatprep.subr.bf16.mxu0 0
    %1204 = vmatpush1.bf16.msra.mxu0 0
    %1205 = vmatprep.subr.bf16.mxu0 0
    %1206 = vmatpush1.bf16.msra.mxu0 0
    %1207 = vmatprep.subr.bf16.mxu0 0
    %1208 = vmatpush1.bf16.msra.mxu0 0
    %1209 = vmatprep.subr.bf16.mxu0 0
    %1210 = vmatpush1.bf16.msra.mxu0 0
    %1211 = vmatprep.subr.bf16.mxu0 0
    %1212 = vmatpush1.bf16.msra.mxu0 0
    %1213 = vmatprep.subr.bf16.mxu0 0
    %1214 = vmatpush1.bf16.msra.mxu0 0
    %1215 = vmatprep.subr.bf16.mxu0 0
    %1216 = vmatpush1.bf16.msra.mxu0 0
    %1217 = vmatprep.subr.bf16.mxu0 0
    %1218 = vmatpush1.bf16.msra.mxu0 0
    %1219 = vmatprep.subr.bf16.mxu0 0
    %1220 = vmatpush1.bf16.msra.mxu0 0
    %1221 = vmatprep.subr.bf16.mxu0 0
    %1222 = vmatpush1.bf16.msra.mxu0 0
    %1223 = vmatprep.subr.bf16.mxu0 0
    %1224 = vmatpush1.bf16.msra.mxu0 0
    %1225 = vmatprep.subr.bf16.mxu0 0
    %1226 = vmatpush1.bf16.msra.mxu0 0
    %1227 = vmatprep.mubr.bf16.mxu0 0
    %1228 = vmatmul.mubr.bf16.gmra.mrb[0].mxu0 %v1190
    %v1229 = vpop.f32.mrb[0].mxu0
    %v1230 = vadd.f32 0.0, %v1229
    %v1231 = vpop.f32.mrb[0].mxu0
    %v1232 = vpop.f32.mrb[0].mxu0
    %v1233 = vadd.f32 0.0, %v1232
    %v1234 = vpop.f32.mrb[0].mxu0
    %1235 = vmatprep.mubr.bf16.mxu0 0
    %1236 = vmatmul.mubr.bf16.gmra.mrb[0].mxu0 %v1193
    %v1237 = vpop.f32.mrb[0].mxu0
    %v1238 = vadd.f32 0.0, %v1237
    %v1239 = vpop.f32.mrb[0].mxu0
    %v1240 = vpop.f32.mrb[0].mxu0
    %v1241 = vadd.f32 0.0, %v1240
    %v1242 = vpop.f32.mrb[0].mxu0
    %1243 = vdwg.mxu0
    %v1248 = vunpack.c.l.b16 %v1124
    %v1249 = vunpack.c.l.b16 %v1125
    %v1250 = vunpack.c.l.b16 %v1126
    %v1251 = vunpack.c.l.b16 %v1127
    %v1252 = vpack.c.b16 %v1249, %v1248
    %v1253 = vpack.c.b16 %v1251, %v1250
    %v1255 = vsel %vm762, %v1252, 0
    %v1258 = vsel %vm762, %v1253, 0
    %1260 = vmatprep.subr.bf16.mxu0 0
    %1261 = vmatpush1.bf16.msra.mxu0 %v1177
    %1262 = vmatprep.subr.bf16.mxu0 0
    %1263 = vmatpush1.bf16.msra.mxu0 %v1178
    %1264 = vmatprep.subr.bf16.mxu0 0
    %1265 = vmatpush1.bf16.msra.mxu0 0
    %1266 = vmatprep.subr.bf16.mxu0 0
    %1267 = vmatpush1.bf16.msra.mxu0 0
    %1268 = vmatprep.subr.bf16.mxu0 0
    %1269 = vmatpush1.bf16.msra.mxu0 0
    %1270 = vmatprep.subr.bf16.mxu0 0
    %1271 = vmatpush1.bf16.msra.mxu0 0
    %1272 = vmatprep.subr.bf16.mxu0 0
    %1273 = vmatpush1.bf16.msra.mxu0 0
    %1274 = vmatprep.subr.bf16.mxu0 0
    %1275 = vmatpush1.bf16.msra.mxu0 0
    %1276 = vmatprep.subr.bf16.mxu0 0
    %1277 = vmatpush1.bf16.msra.mxu0 0
    %1278 = vmatprep.subr.bf16.mxu0 0
    %1279 = vmatpush1.bf16.msra.mxu0 0
    %1280 = vmatprep.subr.bf16.mxu0 0
    %1281 = vmatpush1.bf16.msra.mxu0 0
    %1282 = vmatprep.subr.bf16.mxu0 0
    %1283 = vmatpush1.bf16.msra.mxu0 0
    %1284 = vmatprep.subr.bf16.mxu0 0
    %1285 = vmatpush1.bf16.msra.mxu0 0
    %1286 = vmatprep.subr.bf16.mxu0 0
    %1287 = vmatpush1.bf16.msra.mxu0 0
    %1288 = vmatprep.subr.bf16.mxu0 0
    %1289 = vmatpush1.bf16.msra.mxu0 0
    %1290 = vmatprep.subr.bf16.mxu0 0
    %1291 = vmatpush1.bf16.msra.mxu0 0
    %1292 = vmatprep.mubr.bf16.mxu0 0
    %1293 = vmatmul.mubr.bf16.gmra.mrb[0].mxu0 %v1255
    %v1294 = vpop.f32.mrb[0].mxu0
    %v1295 = vadd.f32 0.0, %v1294
    %v1296 = vpop.f32.mrb[0].mxu0
    %v1297 = vpop.f32.mrb[0].mxu0
    %v1298 = vadd.f32 0.0, %v1297
    %v1299 = vpop.f32.mrb[0].mxu0
    %1300 = vmatprep.mubr.bf16.mxu0 0
    %1301 = vmatmul.mubr.bf16.gmra.mrb[0].mxu0 %v1258
    %v1302 = vpop.f32.mrb[0].mxu0
    %v1303 = vadd.f32 0.0, %v1302
    %v1304 = vpop.f32.mrb[0].mxu0
    %v1305 = vpop.f32.mrb[0].mxu0
    %v1306 = vadd.f32 0.0, %v1305
    %v1307 = vpop.f32.mrb[0].mxu0
    %1308 = vdwg.mxu0
    %v1309 = vpack.c.bf16 %v1233, %v1230
    %v1310 = vpack.c.bf16 %v1298, %v1295
    %v1311 = vpack.c.bf16 %v1241, %v1238
    %v1312 = vpack.c.bf16 %v1306, %v1303
    %v1314 = vlaneseq
    %v1315 = vshrl.u32 %v1314, 7
    %v1316 = vsub.s32 0, %v1315
    %v1317 = vrot.slane %v1176, %v1316
    %v1367 = vunpack.c.l.b16 %v1128
    %v1368 = vunpack.c.l.b16 %v1129
    %v1369 = vunpack.c.l.b16 %v1130
    %v1370 = vunpack.c.l.b16 %v1131
    %v1371 = vunpack.c.l.b16 %v1132
    %v1372 = vunpack.c.l.b16 %v1133
    %v1373 = vunpack.c.l.b16 %v1134
    %v1374 = vunpack.c.l.b16 %v1135
    %v1375 = vunpack.c.l.b16 %v1136
    %v1376 = vunpack.c.l.b16 %v1137
    %v1377 = vunpack.c.l.b16 %v1138
    %v1378 = vunpack.c.l.b16 %v1139
    %v1379 = vunpack.c.l.b16 %v1140
    %v1380 = vunpack.c.l.b16 %v1141
    %v1381 = vunpack.c.l.b16 %v1142
    %v1382 = vunpack.c.l.b16 %v1143
    %v1383 = vunpack.c.l.b16 %v1144
    %v1384 = vunpack.c.l.b16 %v1145
    %v1385 = vunpack.c.l.b16 %v1146
    %v1386 = vunpack.c.l.b16 %v1147
    %v1387 = vunpack.c.l.b16 %v1148
    %v1388 = vunpack.c.l.b16 %v1149
    %v1389 = vunpack.c.l.b16 %v1150
    %v1390 = vunpack.c.l.b16 %v1151
    %v1391 = vunpack.c.l.b16 %v1152
    %v1392 = vunpack.c.l.b16 %v1153
    %v1393 = vunpack.c.l.b16 %v1154
    %v1394 = vunpack.c.l.b16 %v1155
    %v1395 = vunpack.c.l.b16 %v1156
    %v1396 = vunpack.c.l.b16 %v1157
    %v1397 = vunpack.c.l.b16 %v1158
    %v1398 = vunpack.c.l.b16 %v1159
    %v1399 = vunpack.c.l.b16 %v1160
    %v1400 = vunpack.c.l.b16 %v1161
    %v1401 = vunpack.c.l.b16 %v1162
    %v1402 = vunpack.c.l.b16 %v1163
    %v1403 = vunpack.c.l.b16 %v1164
    %v1404 = vunpack.c.l.b16 %v1165
    %v1405 = vunpack.c.l.b16 %v1166
    %v1406 = vunpack.c.l.b16 %v1167
    %v1407 = vunpack.c.l.b16 %v1168
    %v1408 = vunpack.c.l.b16 %v1169
    %v1409 = vunpack.c.l.b16 %v1170
    %v1410 = vunpack.c.l.b16 %v1171
    %v1411 = vunpack.c.l.b16 %v1172
    %v1412 = vunpack.c.l.b16 %v1173
    %v1413 = vunpack.c.l.b16 %v1174
    %v1414 = vunpack.c.l.b16 %v1175
    %v1415 = vpack.c.b16 %v1368, %v1367
    %v1416 = vpack.c.b16 %v1370, %v1369
    %v1417 = vpack.c.b16 %v1372, %v1371
    %v1418 = vpack.c.b16 %v1374, %v1373
    %v1419 = vpack.c.b16 %v1376, %v1375
    %v1420 = vpack.c.b16 %v1378, %v1377
    %v1421 = vpack.c.b16 %v1380, %v1379
    %v1422 = vpack.c.b16 %v1382, %v1381
    %v1423 = vpack.c.b16 %v1384, %v1383
    %v1424 = vpack.c.b16 %v1386, %v1385
    %v1425 = vpack.c.b16 %v1388, %v1387
    %v1426 = vpack.c.b16 %v1390, %v1389
    %v1427 = vpack.c.b16 %v1392, %v1391
    %v1428 = vpack.c.b16 %v1394, %v1393
    %v1429 = vpack.c.b16 %v1396, %v1395
    %v1430 = vpack.c.b16 %v1398, %v1397
    %v1431 = vpack.c.b16 %v1400, %v1399
    %v1432 = vpack.c.b16 %v1402, %v1401
    %v1433 = vpack.c.b16 %v1404, %v1403
    %v1434 = vpack.c.b16 %v1406, %v1405
    %v1435 = vpack.c.b16 %v1408, %v1407
    %v1436 = vpack.c.b16 %v1410, %v1409
    %v1437 = vpack.c.b16 %v1412, %v1411
    %v1438 = vpack.c.b16 %v1414, %v1413
    %1463 = vmatprep.subr.bf16.mxu0 0
    %1464 = vmatpush1.bf16.msra.mxu0 %v1415
    %1465 = vmatprep.subr.bf16.mxu0 0
    %1466 = vmatpush1.bf16.msra.mxu0 %v1416
    %1467 = vmatprep.subr.bf16.mxu0 0
    %1468 = vmatpush1.bf16.msra.mxu0 %v1417
    %1469 = vmatprep.subr.bf16.mxu0 0
    %1470 = vmatpush1.bf16.msra.mxu0 %v1418
    %1471 = vmatprep.subr.bf16.mxu0 0
    %1472 = vmatpush1.bf16.msra.mxu0 %v1419
    %1473 = vmatprep.subr.bf16.mxu0 0
    %1474 = vmatpush1.bf16.msra.mxu0 %v1420
    %1475 = vmatprep.subr.bf16.mxu0 0
    %1476 = vmatpush1.bf16.msra.mxu0 %v1421
    %1477 = vmatprep.subr.bf16.mxu0 0
    %1478 = vmatpush1.bf16.msra.mxu0 %v1422
    %1479 = vmatprep.subr.bf16.mxu0 0
    %1480 = vmatpush1.bf16.msra.mxu0 %v1423
    %1481 = vmatprep.subr.bf16.mxu0 0
    %1482 = vmatpush1.bf16.msra.mxu0 %v1424
    %1483 = vmatprep.subr.bf16.mxu0 0
    %1484 = vmatpush1.bf16.msra.mxu0 %v1425
    %1485 = vmatprep.subr.bf16.mxu0 0
    %1486 = vmatpush1.bf16.msra.mxu0 %v1426
    %1487 = vmatprep.subr.bf16.mxu0 0
    %1488 = vmatpush1.bf16.msra.mxu0 %v1427
    %1489 = vmatprep.subr.bf16.mxu0 0
    %1490 = vmatpush1.bf16.msra.mxu0 %v1428
    %1491 = vmatprep.subr.bf16.mxu0 0
    %1492 = vmatpush1.bf16.msra.mxu0 %v1429
    %1493 = vmatprep.subr.bf16.mxu0 0
    %1494 = vmatpush1.bf16.msra.mxu0 %v1430
    %1495 = vmatprep.mubr.bf16.mxu0 %v1177
    %1496 = vmatmul.mubr.bf16.gmra.mrb[0].mxu0 %v1309
    %v1497 = vpop.f32.mrb[0].mxu0
    %v1498 = vadd.f32 %v1317, %v1497
    %v1499 = vpop.f32.mrb[0].mxu0
    %v1500 = vpop.f32.mrb[0].mxu0
    %v1501 = vadd.f32 %v1317, %v1500
    %v1502 = vpop.f32.mrb[0].mxu0
    %1503 = vmatprep.mubr.bf16.mxu0 %v1178
    %1504 = vmatmul.mubr.bf16.gmra.mrb[0].mxu0 %v1311
    %v1505 = vpop.f32.mrb[0].mxu0
    %v1506 = vadd.f32 %v1317, %v1505
    %v1507 = vpop.f32.mrb[0].mxu0
    %v1508 = vpop.f32.mrb[0].mxu0
    %v1509 = vadd.f32 %v1317, %v1508
    %v1510 = vpop.f32.mrb[0].mxu0
    %1511 = vdwg.mxu0
    %1512 = vmatprep.subr.bf16.mxu0 0
    %1513 = vmatpush1.bf16.msra.mxu0 %v1431
    %1514 = vmatprep.subr.bf16.mxu0 0
    %1515 = vmatpush1.bf16.msra.mxu0 %v1432
    %1516 = vmatprep.subr.bf16.mxu0 0
    %1517 = vmatpush1.bf16.msra.mxu0 %v1433
    %1518 = vmatprep.subr.bf16.mxu0 0
    %1519 = vmatpush1.bf16.msra.mxu0 %v1434
    %1520 = vmatprep.subr.bf16.mxu0 0
    %1521 = vmatpush1.bf16.msra.mxu0 %v1435
    %1522 = vmatprep.subr.bf16.mxu0 0
    %1523 = vmatpush1.bf16.msra.mxu0 %v1436
    %1524 = vmatprep.subr.bf16.mxu0 0
    %1525 = vmatpush1.bf16.msra.mxu0 %v1437
    %1526 = vmatprep.subr.bf16.mxu0 0
    %1527 = vmatpush1.bf16.msra.mxu0 %v1438
    %1528 = vmatprep.subr.bf16.mxu0 0
    %1529 = vmatpush1.bf16.msra.mxu0 0
    %1530 = vmatprep.subr.bf16.mxu0 0
    %1531 = vmatpush1.bf16.msra.mxu0 0
    %1532 = vmatprep.subr.bf16.mxu0 0
    %1533 = vmatpush1.bf16.msra.mxu0 0
    %1534 = vmatprep.subr.bf16.mxu0 0
    %1535 = vmatpush1.bf16.msra.mxu0 0
    %1536 = vmatprep.subr.bf16.mxu0 0
    %1537 = vmatpush1.bf16.msra.mxu0 0
    %1538 = vmatprep.subr.bf16.mxu0 0
    %1539 = vmatpush1.bf16.msra.mxu0 0
    %1540 = vmatprep.subr.bf16.mxu0 0
    %1541 = vmatpush1.bf16.msra.mxu0 0
    %1542 = vmatprep.subr.bf16.mxu0 0
    %1543 = vmatpush1.bf16.msra.mxu0 0
    %1544 = vmatprep.mubr.bf16.mxu0 0
    %1545 = vmatmul.mubr.bf16.gmra.mrb[0].mxu0 %v1310
    %v1546 = vpop.f32.mrb[0].mxu0
    %v1547 = vadd.f32 %v1498, %v1546
    %v1548 = vpop.f32.mrb[0].mxu0
    %v1549 = vpop.f32.mrb[0].mxu0
    %v1550 = vadd.f32 %v1501, %v1549
    %v1551 = vpop.f32.mrb[0].mxu0
    %1552 = vmatprep.mubr.bf16.mxu0 0
    %1553 = vmatmul.mubr.bf16.gmra.mrb[0].mxu0 %v1312
    %v1554 = vpop.f32.mrb[0].mxu0
    %v1555 = vadd.f32 %v1506, %v1554
    %v1556 = vpop.f32.mrb[0].mxu0
    %v1557 = vpop.f32.mrb[0].mxu0
    %v1558 = vadd.f32 %v1509, %v1557
    %v1559 = vpop.f32.mrb[0].mxu0
    %1560 = vdwg.mxu0
    %v1561 = vxor.u32 %v1547, 2147483648
    %v1562 = vxor.u32 %v1550, 2147483648
    %v1563 = vxor.u32 %v1555, 2147483648
    %v1564 = vxor.u32 %v1558, 2147483648
    %v1565 = vmul.f32 %v1561, 1.442695
    %v1566 = vpow.pop %v1565
    %v1567 = vmul.f32 %v1562, 1.442695
    %v1568 = vpow.pop %v1567
    %v1569 = vmul.f32 %v1563, 1.442695
    %v1570 = vpow.pop %v1569
    %v1571 = vmul.f32 %v1564, 1.442695
    %v1572 = vpow.pop %v1571
    %v1573 = vadd.f32 %v1566, 1.0
    %v1574 = vadd.f32 %v1568, 1.0
    %v1575 = vadd.f32 %v1570, 1.0
    %v1576 = vadd.f32 %v1572, 1.0
    %v1577 = vrcp.pop %v1573
    %v1578 = vmul.f32 1.0, %v1577
    %v1579 = vrcp.pop %v1574
    %v1580 = vmul.f32 1.0, %v1579
    %v1581 = vrcp.pop %v1575
    %v1582 = vmul.f32 1.0, %v1581
    %v1583 = vrcp.pop %v1576
    %v1584 = vmul.f32 1.0, %v1583
    %v1585 = vld [vmem:[%s22] sm:$0x1]
    %v1587 = vlaneseq
    %v1588 = vshrl.u32 %v1587, 7
    %v1589 = vsub.s32 0, %v1588
    %v1590 = vrot.slane %v1585, %v1589
    %v1592 = vmul.f32 %v1578, %v1590
    %v1593 = vmul.f32 %v1580, %v1590
    %v1594 = vmul.f32 %v1582, %v1590
    %v1595 = vmul.f32 %v1584, %v1590
    %vm1596 = vcmask 392192
    %v1597 = vsel %vm1596, %v1592, 0.0
    %1598 = vadd.xlane.f32.xlu0 %v1597
    %v1599 = vpop.xlane.xlu0 %1598
    %v1600 = vsel %vm1596, %v1593, 0.0
    %1601 = vadd.xlane.f32.xlu0 %v1600
    %v1602 = vpop.xlane.xlu0 %1601
    %v1603 = vsel %vm1596, %v1594, 0.0
    %1604 = vadd.xlane.f32.xlu0 %v1603
    %v1605 = vpop.xlane.xlu0 %1604
    %v1606 = vsel %vm1596, %v1595, 0.0
    %1607 = vadd.xlane.f32.xlu0 %v1606
    %v1608 = vpop.xlane.xlu0 %1607
    %v1609 = vld [vmem:[#allocation2] sm:$0x1]
    %s1610 = vtos %v1609
    %v1611 = vstv %s1610
    %v1612 = vadd.f32 %v1599, %v1611
    %v1613 = vadd.f32 %v1602, %v1611
    %v1614 = vadd.f32 %v1605, %v1611
    %v1615 = vadd.f32 %v1608, %v1611
    %v1616 = vld [vmem:[%s25] sm:$0x1]
    %v1617 = vld [vmem:[%s24] sm:$0xf]
    %v1618 = vld [vmem:[%s24 + $0x4] sm:$0xf]
    %v1619 = vld [vmem:[%s24 + $0x8] sm:$0xf]
    %v1620 = vld [vmem:[%s24 + $0xc] sm:$0xf]
    %v1621 = vunpack.c.l.bf16 %v1617
    %v1622 = vunpack.c.l.bf16 %v1618
    %v1623 = vunpack.c.l.bf16 %v1619
    %v1624 = vunpack.c.l.bf16 %v1620
    %v1625 = vmul.f32 %v1612, %v1621
    %v1626 = vmul.f32 %v1613, %v1622
    %v1627 = vmul.f32 %v1614, %v1623
    %v1628 = vmul.f32 %v1615, %v1624
    %v1629 = vpack.c.bf16 %v1626, %v1625
    %v1630 = vpack.c.bf16 %v1628, %v1627
    %v1632 = vsel %vm762, %v1616, 0
    %1634 = vmatprep.subr.bf16.mxu0 0
    %1635 = vmatpush1.bf16.msra.mxu0 %v1629
    %1636 = vmatprep.subr.bf16.mxu0 0
    %1637 = vmatpush1.bf16.msra.mxu0 %v1630
    %1638 = vmatprep.subr.bf16.mxu0 0
    %1639 = vmatpush1.bf16.msra.mxu0 0
    %1640 = vmatprep.subr.bf16.mxu0 0
    %1641 = vmatpush1.bf16.msra.mxu0 0
    %1642 = vmatprep.subr.bf16.mxu0 0
    %1643 = vmatpush1.bf16.msra.mxu0 0
    %1644 = vmatprep.subr.bf16.mxu0 0
    %1645 = vmatpush1.bf16.msra.mxu0 0
    %1646 = vmatprep.subr.bf16.mxu0 0
    %1647 = vmatpush1.bf16.msra.mxu0 0
    %1648 = vmatprep.subr.bf16.mxu0 0
    %1649 = vmatpush1.bf16.msra.mxu0 0
    %1650 = vmatprep.subr.bf16.mxu0 0
    %1651 = vmatpush1.bf16.msra.mxu0 0
    %1652 = vmatprep.subr.bf16.mxu0 0
    %1653 = vmatpush1.bf16.msra.mxu0 0
    %1654 = vmatprep.subr.bf16.mxu0 0
    %1655 = vmatpush1.bf16.msra.mxu0 0
    %1656 = vmatprep.subr.bf16.mxu0 0
    %1657 = vmatpush1.bf16.msra.mxu0 0
    %1658 = vmatprep.subr.bf16.mxu0 0
    %1659 = vmatpush1.bf16.msra.mxu0 0
    %1660 = vmatprep.subr.bf16.mxu0 0
    %1661 = vmatpush1.bf16.msra.mxu0 0
    %1662 = vmatprep.subr.bf16.mxu0 0
    %1663 = vmatpush1.bf16.msra.mxu0 0
    %1664 = vmatprep.subr.bf16.mxu0 0
    %1665 = vmatpush1.bf16.msra.mxu0 0
    %1666 = vmatprep.mubr.bf16.mxu0 0
    %1667 = vmatmul.mubr.bf16.gmra.mrb[0].mxu0 %v1632
    %v1668 = vpop.f32.mrb[0].mxu0
    %v1669 = vadd.f32 0.0, %v1668
    %v1670 = vpop.f32.mrb[0].mxu0
    %v1671 = vpop.f32.mrb[0].mxu0
    %v1672 = vpop.f32.mrb[0].mxu0
    %1673 = vdwg.mxu0
    %vm1674 = vcmask 123904
    %1675 = vst.msk [vmem:[#allocation3] sm:$0x3] %vm1674, %v1669
    // Predicated region
    $region106: #{forward.1} parent=1 // pred_check
      _
    $region107: #{forward.1} parent=1 // pred_check_branch
      %1677 = sbr.rel (0) target = $region109
    $region108: #{forward.1} parent=1 // pred_region
      %s1679 = ssub.s32 32, 32
      %1680 = vsyncadd [#allocation4], %s1679
      %s1682 = sshll.u32 [#allocation3], 4
      %s1683 = int_to_ptr.vmem [resolvable:$true] %s1682
      %1685 = dma.vmem_to_hbm [thread:$0]  %s1683, 32, %s26, [#allocation4]
    $region109: #{forward.1} parent=1 // pred_fallthru
      _
    // Predicated region
    $region110: #{forward.1} parent=1 // pred_check
      _
    $region111: #{forward.1} parent=1 // pred_check_branch
      %1687 = sbr.rel (0) target = $region113
    $region112: #{forward.1} parent=1 // pred_region
      %1688 = dma.done [#allocation4], 32
    $region113: #{forward.1} parent=1 // pred_fallthru
      _
    %1689 = vsyncpa [#allocation4], 1

</llo_original>
